<compile_context>
chip_gen: v7x
topology: tpu7x:2x2x1
jax: 0.10.0
libtpu: 0.0.40
codegen_flags: <defaults>
</compile_context>

<pallas_src>
import functools
import math

import jax
import jax.numpy as jnp
from jax import lax
from jax.experimental import pallas as pl
from jax.experimental.pallas import tpu as pltpu


# ----------------------------- Pallas kernel ---------------------------------

def _cross_sublayer_kernel(srb1_ref, kv_ref,
                           wq_ref, bq_ref,
                           wo_ref, bo_ref,
                           out_ref,
                           q_scratch, m_scratch, l_scratch, acc_scratch,
                           *, num_heads: int, head_pad: int, eps: float):
    j = pl.program_id(2)
    last_j = pl.num_programs(2) - 1
    half = num_heads * head_pad          # lane offset of V inside the KV slab

    @pl.when(j == 0)
    def _init():
        m_scratch[...] = jnp.full_like(m_scratch, -jnp.inf)
        l_scratch[...] = jnp.zeros_like(l_scratch)
        acc_scratch[...] = jnp.zeros_like(acc_scratch)
        # LayerNorm statistics in f32; affine (gamma/beta) and 1/sqrt(hd) are
        # folded into wq/bq in the wrapper.  Q is computed once per (b, i).
        x = srb1_ref[0]                                            # (tq, D) f32
        mu = jnp.mean(x, axis=-1, keepdims=True)
        xc = x - mu
        var = jnp.mean(xc * xc, axis=-1, keepdims=True)
        n1 = xc * lax.rsqrt(var + eps)
        q = jnp.dot(n1.astype(jnp.bfloat16), wq_ref[...],
                    preferred_element_type=jnp.float32) + bq_ref[...]
        q_scratch[...] = q.astype(jnp.bfloat16)                    # (tq, H*hp)

    # KV tile was projected outside the kernel (bf16, per-head lanes padded
    # to 128), so per j-step we only stream it in and run attention.
    kv = kv_ref[0]                                                 # (tk, 2*H*hp)
    q_all = q_scratch[...]                                         # (tq, H*hp)

    # Per-head online-softmax (flash) update.  All slices below are at
    # 128-lane aligned offsets -> free views, no relayout copies.
    for h in range(num_heads):
        lo = h * head_pad
        qh = q_all[:, lo:lo + head_pad]                            # (tq, hp)
        kh = kv[:, lo:lo + head_pad]                               # (tk, hp)
        vh = kv[:, half + lo:half + lo + head_pad]                 # (tk, hp)
        # q @ k^T without an explicit transpose (contract last dims); padded
        # lanes of q/k are zero so the contraction is exact.
        s = lax.dot_general(qh, kh, (((1,), (1,)), ((), ())),
                            preferred_element_type=jnp.float32)    # (tq, tk)
        m_prev = m_scratch[h]                                      # (tq, 1)
        m_new = jnp.maximum(m_prev, jnp.max(s, axis=-1, keepdims=True))
        alpha = jnp.exp(m_prev - m_new)                            # (tq, 1)
        p = jnp.exp(s - m_new)                                     # (tq, tk) f32
        l_scratch[h] = alpha * l_scratch[h] + jnp.sum(p, axis=-1, keepdims=True)
        acc_scratch[h] = alpha * acc_scratch[h] + jnp.dot(
            p.astype(jnp.bfloat16), vh, preferred_element_type=jnp.float32)
        m_scratch[h] = m_new

    @pl.when(j == last_j)
    def _finalize():
        # Deferred softmax normalization on the per-head (tq, hp) accumulators,
        # then ONE lane-dense (tq, H*hp) @ (H*hp, D) output projection.
        heads = []
        for h in range(num_heads):
            inv_l = pl.reciprocal(l_scratch[h], approx=True)       # (tq, 1)
            heads.append((acc_scratch[h] * inv_l).astype(jnp.bfloat16))
        o_slab = jnp.concatenate(heads, axis=-1)                   # (tq, H*hp)
        mha = jnp.dot(o_slab, wo_ref[...],
                      preferred_element_type=jnp.float32) + bo_ref[...]
        # Residual: srb1 * 2 + dropout(mha); dropout is identity in eval mode.
        out_ref[0] = (srb1_ref[0] * 2.0 + mha).astype(out_ref.dtype)


# ------------------------------- Wrapper --------------------------------------

def cross_sublayer_logic(srb1, srb2, params, *, num_heads=4, eps=1e-5,
                         block_q=128, block_k=128):
    """srb1: (B, S1, D), srb2: (B, S2, D).  Returns (B, S1, D)."""
    B, S1, D = srb1.shape
    _, S2, _ = srb2.shape
    assert D % num_heads == 0
    head_dim = D // num_heads
    head_pad = ((head_dim + 127) // 128) * 128      # 128-lane aligned head slot
    Hp = num_heads * head_pad
    scale = 1.0 / math.sqrt(head_dim)

    tq = min(block_q, S1)
    tk = min(block_k, S2)
    assert S1 % tq == 0 and S2 % tk == 0, "sequence lengths must divide the tiles"

    gamma = params["gamma"].astype(jnp.float32)
    beta = params["beta"].astype(jnp.float32)

    def fold(w, b):
        # LN(x) @ W + b == ((x - mu) * rsqrt(var+eps)) @ (gamma[:,None] * W)
        #                  + (b + beta @ W)
        w = w.astype(jnp.float32)
        return gamma[:, None] * w, b.astype(jnp.float32) + beta @ w

    def pad_cols(w):   # (D, H*hd) -> (D, H*hp), zero-pad each head's columns
        w3 = w.reshape(D, num_heads, head_dim)
        w3 = jnp.pad(w3, ((0, 0), (0, 0), (0, head_pad - head_dim)))
        return w3.reshape(D, Hp)

    def pad_vec(b):    # (H*hd,) -> (H*hp,)
        b2 = b.reshape(num_heads, head_dim)
        b2 = jnp.pad(b2, ((0, 0), (0, head_pad - head_dim)))
        return b2.reshape(Hp)

    def pad_rows(w):   # (H*hd, D) -> (H*hp, D)
        w3 = w.astype(jnp.float32).reshape(num_heads, head_dim, D)
        w3 = jnp.pad(w3, ((0, 0), (0, head_pad - head_dim), (0, 0)))
        return w3.reshape(Hp, D)

    wq_f, bq_f = fold(params["wq"], params["bq"])
    wk_f, bk_f = fold(params["wk"], params["bk"])
    wv_f, bv_f = fold(params["wv"], params["bv"])

    # Q weights: LN affine + 1/sqrt(hd) folded, per-head lane groups 128-padded.
    wq_pad = pad_cols(wq_f * scale).astype(jnp.bfloat16)            # (D, Hp)
    bq_pad = (pad_vec(bq_f * scale)).reshape(1, Hp).astype(jnp.float32)

    # K/V projected ONCE with plain XLA (feedback option (c)); padded lanes
    # are exact zeros so in-kernel contractions over hp lanes stay exact.
    wkv_pad = jnp.concatenate([pad_cols(wk_f), pad_cols(wv_f)], axis=1)   # (D, 2Hp)
    bkv_pad = jnp.concatenate([pad_vec(bk_f), pad_vec(bv_f)], axis=0)     # (2Hp,)
    s2f = srb2.astype(jnp.float32)
    mu2 = jnp.mean(s2f, axis=-1, keepdims=True)
    xc2 = s2f - mu2
    var2 = jnp.mean(xc2 * xc2, axis=-1, keepdims=True)
    n2 = xc2 * lax.rsqrt(var2 + eps)
    kv = jnp.dot(n2.astype(jnp.bfloat16), wkv_pad.astype(jnp.bfloat16),
                 preferred_element_type=jnp.float32) + bkv_pad
    kv = kv.astype(jnp.bfloat16)                                          # (B, S2, 2Hp)

    wo_pad = pad_rows(params["wo"]).astype(jnp.bfloat16)                  # (Hp, D)
    bo = params["bo"].astype(jnp.float32).reshape(1, D)

    kernel = functools.partial(_cross_sublayer_kernel, num_heads=num_heads,
                               head_pad=head_pad, eps=eps)

    grid = (B, S1 // tq, S2 // tk)

    # Derive the VMEM budget from the hardware (v7x: 64 MiB, v5e/v6e: 128 MiB)
    # and leave ~16 MiB headroom for compiler scratch / pipeline buffers.
    try:
        cap = getattr(pltpu.get_tpu_info(), "vmem_capacity_bytes", None)
    except Exception:
        cap = None
    cp_kwargs = dict(dimension_semantics=("parallel", "parallel", "arbitrary"))
    if cap and int(cap) > (32 << 20):
        cp_kwargs["vmem_limit_bytes"] = int(cap) - (16 << 20)

    # Constant-index weights: single buffer (double-buffering only wastes VMEM).
    weight_kw = dict(pipeline_mode=pl.Buffered(1))

    return pl.pallas_call(
        kernel,
        out_shape=jax.ShapeDtypeStruct((B, S1, D), srb1.dtype),
        grid_spec=pltpu.PrefetchScalarGridSpec(
            num_scalar_prefetch=0,
            grid=grid,
            in_specs=[
                pl.BlockSpec((1, tq, D), lambda b, i, j: (b, i, 0)),           # srb1
                pl.BlockSpec((1, tk, 2 * Hp), lambda b, i, j: (b, j, 0)),      # kv (bf16)
                pl.BlockSpec((D, Hp), lambda b, i, j: (0, 0), **weight_kw),    # wq (folded)
                pl.BlockSpec((1, Hp), lambda b, i, j: (0, 0), **weight_kw),    # bq
                pl.BlockSpec((Hp, D), lambda b, i, j: (0, 0), **weight_kw),    # wo (row-pad)
                pl.BlockSpec((1, D), lambda b, i, j: (0, 0), **weight_kw),     # bo
            ],
            out_specs=pl.BlockSpec((1, tq, D), lambda b, i, j: (b, i, 0)),
            scratch_shapes=[
                pltpu.VMEM((tq, Hp), jnp.bfloat16),                       # scaled q
                pltpu.VMEM((num_heads, tq, 1), jnp.float32),              # running max
                pltpu.VMEM((num_heads, tq, 1), jnp.float32),              # running sum
                pltpu.VMEM((num_heads, tq, head_pad), jnp.float32),       # output acc
            ],
        ),
        compiler_params=pltpu.CompilerParams(**cp_kwargs),
    )(srb1, kv, wq_pad, bq_pad, wo_pad, bo)


# ------------------------------ Reference -------------------------------------

def _reference(srb1, srb2, params, num_heads=4, eps=1e-5):
    def ln(x):
        mu = jnp.mean(x, axis=-1, keepdims=True)
        var = jnp.mean((x - mu) ** 2, axis=-1, keepdims=True)
        return (x - mu) * lax.rsqrt(var + eps) * params["gamma"] + params["beta"]

    n1, n2 = ln(srb1), ln(srb2)
    q = n1 @ params["wq"] + params["bq"]
    k = n2 @ params["wk"] + params["bk"]
    v = n2 @ params["wv"] + params["bv"]
    B, S1, D = q.shape
    S2 = k.shape[1]
    hd = D // num_heads
    qh = q.reshape(B, S1, num_heads, hd).transpose(0, 2, 1, 3)
    kh = k.reshape(B, S2, num_heads, hd).transpose(0, 2, 1, 3)
    vh = v.reshape(B, S2, num_heads, hd).transpose(0, 2, 1, 3)
    scores = jnp.einsum("bhqd,bhkd->bhqk", qh, kh) / math.sqrt(hd)
    p = jax.nn.softmax(scores, axis=-1)
    o = jnp.einsum("bhqk,bhkd->bhqd", p, vh).transpose(0, 2, 1, 3).reshape(B, S1, D)
    return srb1 * 2.0 + (o @ params["wo"] + params["bo"])


# --------------------------------- Main ---------------------------------------

if __name__ == "__main__":
    B, S1, S2, D, H = 2, 8, 8, 32, 4

    key = jax.random.PRNGKey(0)
    ks = jax.random.split(key, 12)

    srb1 = jax.random.normal(ks[0], (B, S1, D), dtype=jnp.float32)
    srb2 = jax.random.normal(ks[1], (B, S2, D), dtype=jnp.float32)

    init = lambda k, shape: (jax.random.normal(k, shape, dtype=jnp.float32)
                             * (1.0 / math.sqrt(shape[0])))
    params = {
        "gamma": 1.0 + 0.1 * jax.random.normal(ks[6], (D,), dtype=jnp.float32),
        "beta": 0.05 * jax.random.normal(ks[7], (D,), dtype=jnp.float32),
        "wq": init(ks[2], (D, D)), "bq": 0.01 * jax.random.normal(ks[8], (D,), jnp.float32),
        "wk": init(ks[3], (D, D)), "bk": 0.01 * jax.random.normal(ks[9], (D,), jnp.float32),
        "wv": init(ks[4], (D, D)), "bv": 0.01 * jax.random.normal(ks[10], (D,), jnp.float32),
        "wo": init(ks[5], (D, D)), "bo": 0.01 * jax.random.normal(ks[11], (D,), jnp.float32),
    }

    out = cross_sublayer_logic(srb1, srb2, params, num_heads=H)
    out = jax.block_until_ready(out)

    ref = _reference(srb1, srb2, params, num_heads=H)
    assert out.shape == (B, S1, D)
    max_err = jnp.max(jnp.abs(out - ref))
    # Kernel feeds the MXU bf16 (f32 accumulation) and uses an approx
    # reciprocal for the softmax denominator, so compare with a bf16-level
    # tolerance against the pure-f32 reference.
    assert max_err < 5e-2, f"max abs err = {max_err}"

    print("KERNEL_OK")
</pallas_src>

<mosaic_0001>
module attributes {stable_mosaic.version = 11 : i64} {
  func.func @_cross_sublayer_kernel(%arg0: i32, %arg1: i32, %arg2: i32, %arg3: memref<1x8x32xf32, #tpu.memory_space<vmem>>, %arg4: memref<1x8x1024xbf16, #tpu.memory_space<vmem>>, %arg5: memref<32x512xbf16, #tpu.memory_space<vmem>>, %arg6: memref<1x512xf32, #tpu.memory_space<vmem>>, %arg7: memref<512x32xbf16, #tpu.memory_space<vmem>>, %arg8: memref<1x32xf32, #tpu.memory_space<vmem>>, %arg9: memref<1x8x32xf32, #tpu.memory_space<vmem>>, %arg10: memref<8x512xbf16, #tpu.memory_space<vmem>>, %arg11: memref<4x8x1xf32, #tpu.memory_space<vmem>>, %arg12: memref<4x8x1xf32, #tpu.memory_space<vmem>>, %arg13: memref<4x8x128xf32, #tpu.memory_space<vmem>>) attributes {dimension_semantics = [#tpu.dimension_semantics<parallel>, #tpu.dimension_semantics<parallel>, #tpu.dimension_semantics<arbitrary>], iteration_bounds = array<i64: 2, 1, 1>, scalar_prefetch = 0 : i64, scratch_operands = 4 : i64, tpu.core_type = #tpu.core_type<tc>, window_params = [{transform_indices = @transform_0, window_bounds = array<i64: 1, 8, 32>}, {transform_indices = @transform_1, window_bounds = array<i64: 1, 8, 1024>}, {pipeline_mode = #tpu.pipeline_mode<synchronous>, transform_indices = @transform_2, window_bounds = array<i64: 32, 512>}, {pipeline_mode = #tpu.pipeline_mode<synchronous>, transform_indices = @transform_3, window_bounds = array<i64: 1, 512>}, {pipeline_mode = #tpu.pipeline_mode<synchronous>, transform_indices = @transform_4, window_bounds = array<i64: 512, 32>}, {pipeline_mode = #tpu.pipeline_mode<synchronous>, transform_indices = @transform_5, window_bounds = array<i64: 1, 32>}, {transform_indices = @transform_6, window_bounds = array<i64: 1, 8, 32>}]} {
    %c0_i32 = arith.constant 0 : i32
    %0 = arith.cmpi eq, %arg2, %c0_i32 : i32
    %1 = arith.extui %0 : i1 to i32
    %c0_i32_0 = arith.constant 0 : i32
    %2 = arith.cmpi ne, %1, %c0_i32_0 : i32
    scf.if %2 {
      %cst_91 = arith.constant 0xFF800000 : f32
      %153 = vector.broadcast %cst_91 : f32 to vector<4x8x1xf32>
      %c0_92 = arith.constant 0 : index
      %c0_93 = arith.constant 0 : index
      %c0_94 = arith.constant 0 : index
      %154 = vector.load %arg11[%c0_92, %c0_93, %c0_94] : memref<4x8x1xf32, #tpu.memory_space<vmem>>, vector<4x8x1xf32>
      tpu.vector_store %arg11[%c0_92, %c0_93, %c0_94], %153 {strides = array<i32>} : memref<4x8x1xf32, #tpu.memory_space<vmem>>, vector<4x8x1xf32>,
      %cst_95 = arith.constant 0.000000e+00 : f32
      %155 = vector.broadcast %cst_95 : f32 to vector<4x8x1xf32>
      %c0_96 = arith.constant 0 : index
      %c0_97 = arith.constant 0 : index
      %c0_98 = arith.constant 0 : index
      %156 = vector.load %arg12[%c0_96, %c0_97, %c0_98] : memref<4x8x1xf32, #tpu.memory_space<vmem>>, vector<4x8x1xf32>
      tpu.vector_store %arg12[%c0_96, %c0_97, %c0_98], %155 {strides = array<i32>} : memref<4x8x1xf32, #tpu.memory_space<vmem>>, vector<4x8x1xf32>,
      %cst_99 = arith.constant 0.000000e+00 : f32
      %157 = vector.broadcast %cst_99 : f32 to vector<4x8x128xf32>
      %c0_100 = arith.constant 0 : index
      %c0_101 = arith.constant 0 : index
      %c0_102 = arith.constant 0 : index
      %158 = vector.load %arg13[%c0_100, %c0_101, %c0_102] : memref<4x8x128xf32, #tpu.memory_space<vmem>>, vector<4x8x128xf32>
      tpu.vector_store %arg13[%c0_100, %c0_101, %c0_102], %157 {strides = array<i32>} : memref<4x8x128xf32, #tpu.memory_space<vmem>>, vector<4x8x128xf32>,
      %c0_103 = arith.constant 0 : index
      %c0_104 = arith.constant 0 : index
      %c0_105 = arith.constant 0 : index
      %159 = vector.load %arg3[%c0_103, %c0_104, %c0_105] : memref<1x8x32xf32, #tpu.memory_space<vmem>>, vector<1x8x32xf32>
      %160 = vector.shape_cast %159 : vector<1x8x32xf32> to vector<8x32xf32>
      %cst_106 = arith.constant dense<0.000000e+00> : vector<8xf32>
      %161 = vector.multi_reduction <add>, %160, %cst_106 [1] : vector<8x32xf32> to vector<8xf32>
      %162 = vector.shape_cast %161 : vector<8xf32> to vector<8x1xf32>
      %cst_107 = arith.constant 3.200000e+01 : f32
      %163 = vector.broadcast %cst_107 : f32 to vector<8x1xf32>
      %164 = arith.divf %162, %163 : vector<8x1xf32>
      %165 = vector.broadcast %164 : vector<8x1xf32> to vector<8x32xf32>
      %166 = arith.subf %160, %165 : vector<8x32xf32>
      %167 = arith.mulf %166, %166 : vector<8x32xf32>
      %cst_108 = arith.constant dense<0.000000e+00> : vector<8xf32>
      %168 = vector.multi_reduction <add>, %167, %cst_108 [1] : vector<8x32xf32> to vector<8xf32>
      %169 = vector.shape_cast %168 : vector<8xf32> to vector<8x1xf32>
      %cst_109 = arith.constant 3.200000e+01 : f32
      %170 = vector.broadcast %cst_109 : f32 to vector<8x1xf32>
      %171 = arith.divf %169, %170 : vector<8x1xf32>
      %cst_110 = arith.constant 9.99999974E-6 : f32
      %172 = vector.broadcast %cst_110 : f32 to vector<8x1xf32>
      %173 = arith.addf %171, %172 : vector<8x1xf32>
      %174 = math.rsqrt %173 : vector<8x1xf32>
      %175 = vector.broadcast %174 : vector<8x1xf32> to vector<8x32xf32>
      %176 = arith.mulf %166, %175 : vector<8x32xf32>
      %177 = arith.truncf %176 : vector<8x32xf32> to vector<8x32xbf16>
      %c0_111 = arith.constant 0 : index
      %c0_112 = arith.constant 0 : index
      %178 = vector.load %arg5[%c0_111, %c0_112] : memref<32x512xbf16, #tpu.memory_space<vmem>>, vector<32x512xbf16>
      %cst_113 = arith.constant dense<0.000000e+00> : vector<8x512xf32>
      %179 = tpu.matmul %177, %178, %cst_113 {dimension_numbers = #tpu.dot_dimension_numbers<[1], [0], [0], [1], [0, 0, 1, 1], [], []>} : vector<8x32xbf16>, vector<32x512xbf16>, vector<8x512xf32> -> vector<8x512xf32>
      %c0_114 = arith.constant 0 : index
      %c0_115 = arith.constant 0 : index
      %180 = vector.load %arg6[%c0_114, %c0_115] : memref<1x512xf32, #tpu.memory_space<vmem>>, vector<1x512xf32>
      %181 = vector.broadcast %180 : vector<1x512xf32> to vector<8x512xf32>
      %182 = arith.addf %179, %181 : vector<8x512xf32>
      %183 = arith.truncf %182 : vector<8x512xf32> to vector<8x512xbf16>
      %c0_116 = arith.constant 0 : index
      %c0_117 = arith.constant 0 : index
      %184 = vector.load %arg10[%c0_116, %c0_117] : memref<8x512xbf16, #tpu.memory_space<vmem>>, vector<8x512xbf16>
      tpu.vector_store %arg10[%c0_116, %c0_117], %183 {strides = array<i32>} : memref<8x512xbf16, #tpu.memory_space<vmem>>, vector<8x512xbf16>,
    } else {
    }
    %c0 = arith.constant 0 : index
    %c0_1 = arith.constant 0 : index
    %c0_2 = arith.constant 0 : index
    %3 = vector.load %arg4[%c0, %c0_1, %c0_2] : memref<1x8x1024xbf16, #tpu.memory_space<vmem>>, vector<1x8x1024xbf16>
    %4 = vector.shape_cast %3 : vector<1x8x1024xbf16> to vector<8x1024xbf16>
    %c0_3 = arith.constant 0 : index
    %c0_4 = arith.constant 0 : index
    %5 = vector.load %arg10[%c0_3, %c0_4] : memref<8x512xbf16, #tpu.memory_space<vmem>>, vector<8x512xbf16>
    %6 = vector.extract_strided_slice %5 {offsets = [0, 0], sizes = [8, 128], strides = [1, 1]} : vector<8x512xbf16> to vector<8x128xbf16>
    %7 = vector.extract_strided_slice %4 {offsets = [0, 0], sizes = [8, 128], strides = [1, 1]} : vector<8x1024xbf16> to vector<8x128xbf16>
    %8 = vector.extract_strided_slice %4 {offsets = [0, 512], sizes = [8, 128], strides = [1, 1]} : vector<8x1024xbf16> to vector<8x128xbf16>
    %cst = arith.constant dense<0.000000e+00> : vector<8x8xf32>
    %9 = tpu.matmul %6, %7, %cst {dimension_numbers = #tpu.dot_dimension_numbers<[1], [1], [0], [0], [0, 0, 1, 0], [], []>} : vector<8x128xbf16>, vector<8x128xbf16>, vector<8x8xf32> -> vector<8x8xf32>
    %c0_5 = arith.constant 0 : index
    %c0_6 = arith.constant 0 : index
    %c0_7 = arith.constant 0 : index
    %10 = vector.load %arg11[%c0_5, %c0_6, %c0_7] : memref<4x8x1xf32, #tpu.memory_space<vmem>>, vector<1x8x1xf32>
    %11 = vector.shape_cast %10 : vector<1x8x1xf32> to vector<8x1xf32>
    %cst_8 = arith.constant dense<0xFF800000> : vector<8xf32>
    %12 = vector.multi_reduction <maximumf>, %9, %cst_8 [1] : vector<8x8xf32> to vector<8xf32>
    %13 = vector.shape_cast %12 : vector<8xf32> to vector<8x1xf32>
    %14 = arith.maximumf %11, %13 : vector<8x1xf32>
    %15 = arith.subf %11, %14 : vector<8x1xf32>
    %16 = math.exp %15 : vector<8x1xf32>
    %17 = vector.broadcast %14 : vector<8x1xf32> to vector<8x8xf32>
    %18 = arith.subf %9, %17 : vector<8x8xf32>
    %19 = math.exp %18 : vector<8x8xf32>
    %c0_9 = arith.constant 0 : index
    %c0_10 = arith.constant 0 : index
    %c0_11 = arith.constant 0 : index
    %20 = vector.load %arg12[%c0_9, %c0_10, %c0_11] : memref<4x8x1xf32, #tpu.memory_space<vmem>>, vector<1x8x1xf32>
    %21 = vector.shape_cast %20 : vector<1x8x1xf32> to vector<8x1xf32>
    %22 = arith.mulf %16, %21 : vector<8x1xf32>
    %cst_12 = arith.constant dense<0.000000e+00> : vector<8xf32>
    %23 = vector.multi_reduction <add>, %19, %cst_12 [1] : vector<8x8xf32> to vector<8xf32>
    %24 = vector.shape_cast %23 : vector<8xf32> to vector<8x1xf32>
    %25 = arith.addf %22, %24 : vector<8x1xf32>
    %c0_13 = arith.constant 0 : index
    %c0_14 = arith.constant 0 : index
    %c0_15 = arith.constant 0 : index
    %26 = vector.load %arg12[%c0_13, %c0_14, %c0_15] : memref<4x8x1xf32, #tpu.memory_space<vmem>>, vector<1x8x1xf32>
    %27 = vector.shape_cast %26 : vector<1x8x1xf32> to vector<8x1xf32>
    %28 = vector.shape_cast %25 : vector<8x1xf32> to vector<1x8x1xf32>
    tpu.vector_store %arg12[%c0_13, %c0_14, %c0_15], %28 {strides = array<i32>} : memref<4x8x1xf32, #tpu.memory_space<vmem>>, vector<1x8x1xf32>,
    %c0_16 = arith.constant 0 : index
    %c0_17 = arith.constant 0 : index
    %c0_18 = arith.constant 0 : index
    %29 = vector.load %arg13[%c0_16, %c0_17, %c0_18] : memref<4x8x128xf32, #tpu.memory_space<vmem>>, vector<1x8x128xf32>
    %30 = vector.shape_cast %29 : vector<1x8x128xf32> to vector<8x128xf32>
    %31 = vector.broadcast %16 : vector<8x1xf32> to vector<8x128xf32>
    %32 = arith.mulf %31, %30 : vector<8x128xf32>
    %33 = arith.truncf %19 : vector<8x8xf32> to vector<8x8xbf16>
    %cst_19 = arith.constant dense<0.000000e+00> : vector<8x128xf32>
    %34 = tpu.matmul %33, %8, %cst_19 {dimension_numbers = #tpu.dot_dimension_numbers<[1], [0], [0], [1], [0, 0, 1, 1], [], []>} : vector<8x8xbf16>, vector<8x128xbf16>, vector<8x128xf32> -> vector<8x128xf32>
    %35 = arith.addf %32, %34 : vector<8x128xf32>
    %c0_20 = arith.constant 0 : index
    %c0_21 = arith.constant 0 : index
    %c0_22 = arith.constant 0 : index
    %36 = vector.load %arg13[%c0_20, %c0_21, %c0_22] : memref<4x8x128xf32, #tpu.memory_space<vmem>>, vector<1x8x128xf32>
    %37 = vector.shape_cast %36 : vector<1x8x128xf32> to vector<8x128xf32>
    %38 = vector.shape_cast %35 : vector<8x128xf32> to vector<1x8x128xf32>
    tpu.vector_store %arg13[%c0_20, %c0_21, %c0_22], %38 {strides = array<i32>} : memref<4x8x128xf32, #tpu.memory_space<vmem>>, vector<1x8x128xf32>,
    %c0_23 = arith.constant 0 : index
    %c0_24 = arith.constant 0 : index
    %c0_25 = arith.constant 0 : index
    %39 = vector.load %arg11[%c0_23, %c0_24, %c0_25] : memref<4x8x1xf32, #tpu.memory_space<vmem>>, vector<1x8x1xf32>
    %40 = vector.shape_cast %39 : vector<1x8x1xf32> to vector<8x1xf32>
    %41 = vector.shape_cast %14 : vector<8x1xf32> to vector<1x8x1xf32>
    tpu.vector_store %arg11[%c0_23, %c0_24, %c0_25], %41 {strides = array<i32>} : memref<4x8x1xf32, #tpu.memory_space<vmem>>, vector<1x8x1xf32>,
    %42 = vector.extract_strided_slice %5 {offsets = [0, 128], sizes = [8, 128], strides = [1, 1]} : vector<8x512xbf16> to vector<8x128xbf16>
    %43 = vector.extract_strided_slice %4 {offsets = [0, 128], sizes = [8, 128], strides = [1, 1]} : vector<8x1024xbf16> to vector<8x128xbf16>
    %44 = vector.extract_strided_slice %4 {offsets = [0, 640], sizes = [8, 128], strides = [1, 1]} : vector<8x1024xbf16> to vector<8x128xbf16>
    %cst_26 = arith.constant dense<0.000000e+00> : vector<8x8xf32>
    %45 = tpu.matmul %42, %43, %cst_26 {dimension_numbers = #tpu.dot_dimension_numbers<[1], [1], [0], [0], [0, 0, 1, 0], [], []>} : vector<8x128xbf16>, vector<8x128xbf16>, vector<8x8xf32> -> vector<8x8xf32>
    %c1 = arith.constant 1 : index
    %c0_27 = arith.constant 0 : index
    %c0_28 = arith.constant 0 : index
    %46 = vector.load %arg11[%c1, %c0_27, %c0_28] : memref<4x8x1xf32, #tpu.memory_space<vmem>>, vector<1x8x1xf32>
    %47 = vector.shape_cast %46 : vector<1x8x1xf32> to vector<8x1xf32>
    %cst_29 = arith.constant dense<0xFF800000> : vector<8xf32>
    %48 = vector.multi_reduction <maximumf>, %45, %cst_29 [1] : vector<8x8xf32> to vector<8xf32>
    %49 = vector.shape_cast %48 : vector<8xf32> to vector<8x1xf32>
    %50 = arith.maximumf %47, %49 : vector<8x1xf32>
    %51 = arith.subf %47, %50 : vector<8x1xf32>
    %52 = math.exp %51 : vector<8x1xf32>
    %53 = vector.broadcast %50 : vector<8x1xf32> to vector<8x8xf32>
    %54 = arith.subf %45, %53 : vector<8x8xf32>
    %55 = math.exp %54 : vector<8x8xf32>
    %c1_30 = arith.constant 1 : index
    %c0_31 = arith.constant 0 : index
    %c0_32 = arith.constant 0 : index
    %56 = vector.load %arg12[%c1_30, %c0_31, %c0_32] : memref<4x8x1xf32, #tpu.memory_space<vmem>>, vector<1x8x1xf32>
    %57 = vector.shape_cast %56 : vector<1x8x1xf32> to vector<8x1xf32>
    %58 = arith.mulf %52, %57 : vector<8x1xf32>
    %cst_33 = arith.constant dense<0.000000e+00> : vector<8xf32>
    %59 = vector.multi_reduction <add>, %55, %cst_33 [1] : vector<8x8xf32> to vector<8xf32>
    %60 = vector.shape_cast %59 : vector<8xf32> to vector<8x1xf32>
    %61 = arith.addf %58, %60 : vector<8x1xf32>
    %c1_34 = arith.constant 1 : index
    %c0_35 = arith.constant 0 : index
    %c0_36 = arith.constant 0 : index
    %62 = vector.load %arg12[%c1_34, %c0_35, %c0_36] : memref<4x8x1xf32, #tpu.memory_space<vmem>>, vector<1x8x1xf32>
    %63 = vector.shape_cast %62 : vector<1x8x1xf32> to vector<8x1xf32>
    %64 = vector.shape_cast %61 : vector<8x1xf32> to vector<1x8x1xf32>
    tpu.vector_store %arg12[%c1_34, %c0_35, %c0_36], %64 {strides = array<i32>} : memref<4x8x1xf32, #tpu.memory_space<vmem>>, vector<1x8x1xf32>,
    %c1_37 = arith.constant 1 : index
    %c0_38 = arith.constant 0 : index
    %c0_39 = arith.constant 0 : index
    %65 = vector.load %arg13[%c1_37, %c0_38, %c0_39] : memref<4x8x128xf32, #tpu.memory_space<vmem>>, vector<1x8x128xf32>
    %66 = vector.shape_cast %65 : vector<1x8x128xf32> to vector<8x128xf32>
    %67 = vector.broadcast %52 : vector<8x1xf32> to vector<8x128xf32>
    %68 = arith.mulf %67, %66 : vector<8x128xf32>
    %69 = arith.truncf %55 : vector<8x8xf32> to vector<8x8xbf16>
    %cst_40 = arith.constant dense<0.000000e+00> : vector<8x128xf32>
    %70 = tpu.matmul %69, %44, %cst_40 {dimension_numbers = #tpu.dot_dimension_numbers<[1], [0], [0], [1], [0, 0, 1, 1], [], []>} : vector<8x8xbf16>, vector<8x128xbf16>, vector<8x128xf32> -> vector<8x128xf32>
    %71 = arith.addf %68, %70 : vector<8x128xf32>
    %c1_41 = arith.constant 1 : index
    %c0_42 = arith.constant 0 : index
    %c0_43 = arith.constant 0 : index
    %72 = vector.load %arg13[%c1_41, %c0_42, %c0_43] : memref<4x8x128xf32, #tpu.memory_space<vmem>>, vector<1x8x128xf32>
    %73 = vector.shape_cast %72 : vector<1x8x128xf32> to vector<8x128xf32>
    %74 = vector.shape_cast %71 : vector<8x128xf32> to vector<1x8x128xf32>
    tpu.vector_store %arg13[%c1_41, %c0_42, %c0_43], %74 {strides = array<i32>} : memref<4x8x128xf32, #tpu.memory_space<vmem>>, vector<1x8x128xf32>,
    %c1_44 = arith.constant 1 : index
    %c0_45 = arith.constant 0 : index
    %c0_46 = arith.constant 0 : index
    %75 = vector.load %arg11[%c1_44, %c0_45, %c0_46] : memref<4x8x1xf32, #tpu.memory_space<vmem>>, vector<1x8x1xf32>
    %76 = vector.shape_cast %75 : vector<1x8x1xf32> to vector<8x1xf32>
    %77 = vector.shape_cast %50 : vector<8x1xf32> to vector<1x8x1xf32>
    tpu.vector_store %arg11[%c1_44, %c0_45, %c0_46], %77 {strides = array<i32>} : memref<4x8x1xf32, #tpu.memory_space<vmem>>, vector<1x8x1xf32>,
    %78 = vector.extract_strided_slice %5 {offsets = [0, 256], sizes = [8, 128], strides = [1, 1]} : vector<8x512xbf16> to vector<8x128xbf16>
    %79 = vector.extract_strided_slice %4 {offsets = [0, 256], sizes = [8, 128], strides = [1, 1]} : vector<8x1024xbf16> to vector<8x128xbf16>
    %80 = vector.extract_strided_slice %4 {offsets = [0, 768], sizes = [8, 128], strides = [1, 1]} : vector<8x1024xbf16> to vector<8x128xbf16>
    %cst_47 = arith.constant dense<0.000000e+00> : vector<8x8xf32>
    %81 = tpu.matmul %78, %79, %cst_47 {dimension_numbers = #tpu.dot_dimension_numbers<[1], [1], [0], [0], [0, 0, 1, 0], [], []>} : vector<8x128xbf16>, vector<8x128xbf16>, vector<8x8xf32> -> vector<8x8xf32>
    %c2 = arith.constant 2 : index
    %c0_48 = arith.constant 0 : index
    %c0_49 = arith.constant 0 : index
    %82 = vector.load %arg11[%c2, %c0_48, %c0_49] : memref<4x8x1xf32, #tpu.memory_space<vmem>>, vector<1x8x1xf32>
    %83 = vector.shape_cast %82 : vector<1x8x1xf32> to vector<8x1xf32>
    %cst_50 = arith.constant dense<0xFF800000> : vector<8xf32>
    %84 = vector.multi_reduction <maximumf>, %81, %cst_50 [1] : vector<8x8xf32> to vector<8xf32>
    %85 = vector.shape_cast %84 : vector<8xf32> to vector<8x1xf32>
    %86 = arith.maximumf %83, %85 : vector<8x1xf32>
    %87 = arith.subf %83, %86 : vector<8x1xf32>
    %88 = math.exp %87 : vector<8x1xf32>
    %89 = vector.broadcast %86 : vector<8x1xf32> to vector<8x8xf32>
    %90 = arith.subf %81, %89 : vector<8x8xf32>
    %91 = math.exp %90 : vector<8x8xf32>
    %c2_51 = arith.constant 2 : index
    %c0_52 = arith.constant 0 : index
    %c0_53 = arith.constant 0 : index
    %92 = vector.load %arg12[%c2_51, %c0_52, %c0_53] : memref<4x8x1xf32, #tpu.memory_space<vmem>>, vector<1x8x1xf32>
    %93 = vector.shape_cast %92 : vector<1x8x1xf32> to vector<8x1xf32>
    %94 = arith.mulf %88, %93 : vector<8x1xf32>
    %cst_54 = arith.constant dense<0.000000e+00> : vector<8xf32>
    %95 = vector.multi_reduction <add>, %91, %cst_54 [1] : vector<8x8xf32> to vector<8xf32>
    %96 = vector.shape_cast %95 : vector<8xf32> to vector<8x1xf32>
    %97 = arith.addf %94, %96 : vector<8x1xf32>
    %c2_55 = arith.constant 2 : index
    %c0_56 = arith.constant 0 : index
    %c0_57 = arith.constant 0 : index
    %98 = vector.load %arg12[%c2_55, %c0_56, %c0_57] : memref<4x8x1xf32, #tpu.memory_space<vmem>>, vector<1x8x1xf32>
    %99 = vector.shape_cast %98 : vector<1x8x1xf32> to vector<8x1xf32>
    %100 = vector.shape_cast %97 : vector<8x1xf32> to vector<1x8x1xf32>
    tpu.vector_store %arg12[%c2_55, %c0_56, %c0_57], %100 {strides = array<i32>} : memref<4x8x1xf32, #tpu.memory_space<vmem>>, vector<1x8x1xf32>,
    %c2_58 = arith.constant 2 : index
    %c0_59 = arith.constant 0 : index
    %c0_60 = arith.constant 0 : index
    %101 = vector.load %arg13[%c2_58, %c0_59, %c0_60] : memref<4x8x128xf32, #tpu.memory_space<vmem>>, vector<1x8x128xf32>
    %102 = vector.shape_cast %101 : vector<1x8x128xf32> to vector<8x128xf32>
    %103 = vector.broadcast %88 : vector<8x1xf32> to vector<8x128xf32>
    %104 = arith.mulf %103, %102 : vector<8x128xf32>
    %105 = arith.truncf %91 : vector<8x8xf32> to vector<8x8xbf16>
    %cst_61 = arith.constant dense<0.000000e+00> : vector<8x128xf32>
    %106 = tpu.matmul %105, %80, %cst_61 {dimension_numbers = #tpu.dot_dimension_numbers<[1], [0], [0], [1], [0, 0, 1, 1], [], []>} : vector<8x8xbf16>, vector<8x128xbf16>, vector<8x128xf32> -> vector<8x128xf32>
    %107 = arith.addf %104, %106 : vector<8x128xf32>
    %c2_62 = arith.constant 2 : index
    %c0_63 = arith.constant 0 : index
    %c0_64 = arith.constant 0 : index
    %108 = vector.load %arg13[%c2_62, %c0_63, %c0_64] : memref<4x8x128xf32, #tpu.memory_space<vmem>>, vector<1x8x128xf32>
    %109 = vector.shape_cast %108 : vector<1x8x128xf32> to vector<8x128xf32>
    %110 = vector.shape_cast %107 : vector<8x128xf32> to vector<1x8x128xf32>
    tpu.vector_store %arg13[%c2_62, %c0_63, %c0_64], %110 {strides = array<i32>} : memref<4x8x128xf32, #tpu.memory_space<vmem>>, vector<1x8x128xf32>,
    %c2_65 = arith.constant 2 : index
    %c0_66 = arith.constant 0 : index
    %c0_67 = arith.constant 0 : index
    %111 = vector.load %arg11[%c2_65, %c0_66, %c0_67] : memref<4x8x1xf32, #tpu.memory_space<vmem>>, vector<1x8x1xf32>
    %112 = vector.shape_cast %111 : vector<1x8x1xf32> to vector<8x1xf32>
    %113 = vector.shape_cast %86 : vector<8x1xf32> to vector<1x8x1xf32>
    tpu.vector_store %arg11[%c2_65, %c0_66, %c0_67], %113 {strides = array<i32>} : memref<4x8x1xf32, #tpu.memory_space<vmem>>, vector<1x8x1xf32>,
    %114 = vector.extract_strided_slice %5 {offsets = [0, 384], sizes = [8, 128], strides = [1, 1]} : vector<8x512xbf16> to vector<8x128xbf16>
    %115 = vector.extract_strided_slice %4 {offsets = [0, 384], sizes = [8, 128], strides = [1, 1]} : vector<8x1024xbf16> to vector<8x128xbf16>
    %116 = vector.extract_strided_slice %4 {offsets = [0, 896], sizes = [8, 128], strides = [1, 1]} : vector<8x1024xbf16> to vector<8x128xbf16>
    %cst_68 = arith.constant dense<0.000000e+00> : vector<8x8xf32>
    %117 = tpu.matmul %114, %115, %cst_68 {dimension_numbers = #tpu.dot_dimension_numbers<[1], [1], [0], [0], [0, 0, 1, 0], [], []>} : vector<8x128xbf16>, vector<8x128xbf16>, vector<8x8xf32> -> vector<8x8xf32>
    %c3 = arith.constant 3 : index
    %c0_69 = arith.constant 0 : index
    %c0_70 = arith.constant 0 : index
    %118 = vector.load %arg11[%c3, %c0_69, %c0_70] : memref<4x8x1xf32, #tpu.memory_space<vmem>>, vector<1x8x1xf32>
    %119 = vector.shape_cast %118 : vector<1x8x1xf32> to vector<8x1xf32>
    %cst_71 = arith.constant dense<0xFF800000> : vector<8xf32>
    %120 = vector.multi_reduction <maximumf>, %117, %cst_71 [1] : vector<8x8xf32> to vector<8xf32>
    %121 = vector.shape_cast %120 : vector<8xf32> to vector<8x1xf32>
    %122 = arith.maximumf %119, %121 : vector<8x1xf32>
    %123 = arith.subf %119, %122 : vector<8x1xf32>
    %124 = math.exp %123 : vector<8x1xf32>
    %125 = vector.broadcast %122 : vector<8x1xf32> to vector<8x8xf32>
    %126 = arith.subf %117, %125 : vector<8x8xf32>
    %127 = math.exp %126 : vector<8x8xf32>
    %c3_72 = arith.constant 3 : index
    %c0_73 = arith.constant 0 : index
    %c0_74 = arith.constant 0 : index
    %128 = vector.load %arg12[%c3_72, %c0_73, %c0_74] : memref<4x8x1xf32, #tpu.memory_space<vmem>>, vector<1x8x1xf32>
    %129 = vector.shape_cast %128 : vector<1x8x1xf32> to vector<8x1xf32>
    %130 = arith.mulf %124, %129 : vector<8x1xf32>
    %cst_75 = arith.constant dense<0.000000e+00> : vector<8xf32>
    %131 = vector.multi_reduction <add>, %127, %cst_75 [1] : vector<8x8xf32> to vector<8xf32>
    %132 = vector.shape_cast %131 : vector<8xf32> to vector<8x1xf32>
    %133 = arith.addf %130, %132 : vector<8x1xf32>
    %c3_76 = arith.constant 3 : index
    %c0_77 = arith.constant 0 : index
    %c0_78 = arith.constant 0 : index
    %134 = vector.load %arg12[%c3_76, %c0_77, %c0_78] : memref<4x8x1xf32, #tpu.memory_space<vmem>>, vector<1x8x1xf32>
    %135 = vector.shape_cast %134 : vector<1x8x1xf32> to vector<8x1xf32>
    %136 = vector.shape_cast %133 : vector<8x1xf32> to vector<1x8x1xf32>
    tpu.vector_store %arg12[%c3_76, %c0_77, %c0_78], %136 {strides = array<i32>} : memref<4x8x1xf32, #tpu.memory_space<vmem>>, vector<1x8x1xf32>,
    %c3_79 = arith.constant 3 : index
    %c0_80 = arith.constant 0 : index
    %c0_81 = arith.constant 0 : index
    %137 = vector.load %arg13[%c3_79, %c0_80, %c0_81] : memref<4x8x128xf32, #tpu.memory_space<vmem>>, vector<1x8x128xf32>
    %138 = vector.shape_cast %137 : vector<1x8x128xf32> to vector<8x128xf32>
    %139 = vector.broadcast %124 : vector<8x1xf32> to vector<8x128xf32>
    %140 = arith.mulf %139, %138 : vector<8x128xf32>
    %141 = arith.truncf %127 : vector<8x8xf32> to vector<8x8xbf16>
    %cst_82 = arith.constant dense<0.000000e+00> : vector<8x128xf32>
    %142 = tpu.matmul %141, %116, %cst_82 {dimension_numbers = #tpu.dot_dimension_numbers<[1], [0], [0], [1], [0, 0, 1, 1], [], []>} : vector<8x8xbf16>, vector<8x128xbf16>, vector<8x128xf32> -> vector<8x128xf32>
    %143 = arith.addf %140, %142 : vector<8x128xf32>
    %c3_83 = arith.constant 3 : index
    %c0_84 = arith.constant 0 : index
    %c0_85 = arith.constant 0 : index
    %144 = vector.load %arg13[%c3_83, %c0_84, %c0_85] : memref<4x8x128xf32, #tpu.memory_space<vmem>>, vector<1x8x128xf32>
    %145 = vector.shape_cast %144 : vector<1x8x128xf32> to vector<8x128xf32>
    %146 = vector.shape_cast %143 : vector<8x128xf32> to vector<1x8x128xf32>
    tpu.vector_store %arg13[%c3_83, %c0_84, %c0_85], %146 {strides = array<i32>} : memref<4x8x128xf32, #tpu.memory_space<vmem>>, vector<1x8x128xf32>,
    %c3_86 = arith.constant 3 : index
    %c0_87 = arith.constant 0 : index
    %c0_88 = arith.constant 0 : index
    %147 = vector.load %arg11[%c3_86, %c0_87, %c0_88] : memref<4x8x1xf32, #tpu.memory_space<vmem>>, vector<1x8x1xf32>
    %148 = vector.shape_cast %147 : vector<1x8x1xf32> to vector<8x1xf32>
    %149 = vector.shape_cast %122 : vector<8x1xf32> to vector<1x8x1xf32>
    tpu.vector_store %arg11[%c3_86, %c0_87, %c0_88], %149 {strides = array<i32>} : memref<4x8x1xf32, #tpu.memory_space<vmem>>, vector<1x8x1xf32>,
    %c0_i32_89 = arith.constant 0 : i32
    %150 = arith.cmpi eq, %arg2, %c0_i32_89 : i32
    %151 = arith.extui %150 : i1 to i32
    %c0_i32_90 = arith.constant 0 : i32
    %152 = arith.cmpi ne, %151, %c0_i32_90 : i32
    scf.if %152 {
      %c0_91 = arith.constant 0 : index
      %c0_92 = arith.constant 0 : index
      %c0_93 = arith.constant 0 : index
      %153 = vector.load %arg12[%c0_91, %c0_92, %c0_93] : memref<4x8x1xf32, #tpu.memory_space<vmem>>, vector<1x8x1xf32>
      %154 = vector.shape_cast %153 : vector<1x8x1xf32> to vector<8x1xf32>
      %155 = tpu.reciprocal %154 {approx = true} : vector<8x1xf32> -> vector<8x1xf32>
      %c0_94 = arith.constant 0 : index
      %c0_95 = arith.constant 0 : index
      %c0_96 = arith.constant 0 : index
      %156 = vector.load %arg13[%c0_94, %c0_95, %c0_96] : memref<4x8x128xf32, #tpu.memory_space<vmem>>, vector<1x8x128xf32>
      %157 = vector.shape_cast %156 : vector<1x8x128xf32> to vector<8x128xf32>
      %158 = vector.broadcast %155 : vector<8x1xf32> to vector<8x128xf32>
      %159 = arith.mulf %157, %158 : vector<8x128xf32>
      %160 = arith.truncf %159 : vector<8x128xf32> to vector<8x128xbf16>
      %c1_97 = arith.constant 1 : index
      %c0_98 = arith.constant 0 : index
      %c0_99 = arith.constant 0 : index
      %161 = vector.load %arg12[%c1_97, %c0_98, %c0_99] : memref<4x8x1xf32, #tpu.memory_space<vmem>>, vector<1x8x1xf32>
      %162 = vector.shape_cast %161 : vector<1x8x1xf32> to vector<8x1xf32>
      %163 = tpu.reciprocal %162 {approx = true} : vector<8x1xf32> -> vector<8x1xf32>
      %c1_100 = arith.constant 1 : index
      %c0_101 = arith.constant 0 : index
      %c0_102 = arith.constant 0 : index
      %164 = vector.load %arg13[%c1_100, %c0_101, %c0_102] : memref<4x8x128xf32, #tpu.memory_space<vmem>>, vector<1x8x128xf32>
      %165 = vector.shape_cast %164 : vector<1x8x128xf32> to vector<8x128xf32>
      %166 = vector.broadcast %163 : vector<8x1xf32> to vector<8x128xf32>
      %167 = arith.mulf %165, %166 : vector<8x128xf32>
      %168 = arith.truncf %167 : vector<8x128xf32> to vector<8x128xbf16>
      %c2_103 = arith.constant 2 : index
      %c0_104 = arith.constant 0 : index
      %c0_105 = arith.constant 0 : index
      %169 = vector.load %arg12[%c2_103, %c0_104, %c0_105] : memref<4x8x1xf32, #tpu.memory_space<vmem>>, vector<1x8x1xf32>
      %170 = vector.shape_cast %169 : vector<1x8x1xf32> to vector<8x1xf32>
      %171 = tpu.reciprocal %170 {approx = true} : vector<8x1xf32> -> vector<8x1xf32>
      %c2_106 = arith.constant 2 : index
      %c0_107 = arith.constant 0 : index
      %c0_108 = arith.constant 0 : index
      %172 = vector.load %arg13[%c2_106, %c0_107, %c0_108] : memref<4x8x128xf32, #tpu.memory_space<vmem>>, vector<1x8x128xf32>
      %173 = vector.shape_cast %172 : vector<1x8x128xf32> to vector<8x128xf32>
      %174 = vector.broadcast %171 : vector<8x1xf32> to vector<8x128xf32>
      %175 = arith.mulf %173, %174 : vector<8x128xf32>
      %176 = arith.truncf %175 : vector<8x128xf32> to vector<8x128xbf16>
      %c3_109 = arith.constant 3 : index
      %c0_110 = arith.constant 0 : index
      %c0_111 = arith.constant 0 : index
      %177 = vector.load %arg12[%c3_109, %c0_110, %c0_111] : memref<4x8x1xf32, #tpu.memory_space<vmem>>, vector<1x8x1xf32>
      %178 = vector.shape_cast %177 : vector<1x8x1xf32> to vector<8x1xf32>
      %179 = tpu.reciprocal %178 {approx = true} : vector<8x1xf32> -> vector<8x1xf32>
      %c3_112 = arith.constant 3 : index
      %c0_113 = arith.constant 0 : index
      %c0_114 = arith.constant 0 : index
      %180 = vector.load %arg13[%c3_112, %c0_113, %c0_114] : memref<4x8x128xf32, #tpu.memory_space<vmem>>, vector<1x8x128xf32>
      %181 = vector.shape_cast %180 : vector<1x8x128xf32> to vector<8x128xf32>
      %182 = vector.broadcast %179 : vector<8x1xf32> to vector<8x128xf32>
      %183 = arith.mulf %181, %182 : vector<8x128xf32>
      %184 = arith.truncf %183 : vector<8x128xf32> to vector<8x128xbf16>
      %185 = tpu.concatenate %160, %168, %176, %184 in 1 : vector<8x128xbf16>, vector<8x128xbf16>, vector<8x128xbf16>, vector<8x128xbf16> -> vector<8x512xbf16>
      %c0_115 = arith.constant 0 : index
      %c0_116 = arith.constant 0 : index
      %186 = vector.load %arg7[%c0_115, %c0_116] : memref<512x32xbf16, #tpu.memory_space<vmem>>, vector<512x32xbf16>
      %cst_117 = arith.constant dense<0.000000e+00> : vector<8x32xf32>
      %187 = tpu.matmul %185, %186, %cst_117 {dimension_numbers = #tpu.dot_dimension_numbers<[1], [0], [0], [1], [0, 0, 1, 1], [], []>} : vector<8x512xbf16>, vector<512x32xbf16>, vector<8x32xf32> -> vector<8x32xf32>
      %c0_118 = arith.constant 0 : index
      %c0_119 = arith.constant 0 : index
      %188 = vector.load %arg8[%c0_118, %c0_119] : memref<1x32xf32, #tpu.memory_space<vmem>>, vector<1x32xf32>
      %189 = vector.broadcast %188 : vector<1x32xf32> to vector<8x32xf32>
      %190 = arith.addf %187, %189 : vector<8x32xf32>
      %c0_120 = arith.constant 0 : index
      %c0_121 = arith.constant 0 : index
      %c0_122 = arith.constant 0 : index
      %191 = vector.load %arg3[%c0_120, %c0_121, %c0_122] : memref<1x8x32xf32, #tpu.memory_space<vmem>>, vector<1x8x32xf32>
      %192 = vector.shape_cast %191 : vector<1x8x32xf32> to vector<8x32xf32>
      %cst_123 = arith.constant 2.000000e+00 : f32
      %193 = vector.broadcast %cst_123 : f32 to vector<8x32xf32>
      %194 = arith.mulf %192, %193 : vector<8x32xf32>
      %195 = arith.addf %194, %190 : vector<8x32xf32>
      %c0_124 = arith.constant 0 : index
      %c0_125 = arith.constant 0 : index
      %c0_126 = arith.constant 0 : index
      %196 = vector.load %arg9[%c0_124, %c0_125, %c0_126] : memref<1x8x32xf32, #tpu.memory_space<vmem>>, vector<1x8x32xf32>
      %197 = vector.shape_cast %196 : vector<1x8x32xf32> to vector<8x32xf32>
      %198 = vector.shape_cast %195 : vector<8x32xf32> to vector<1x8x32xf32>
      tpu.vector_store %arg9[%c0_124, %c0_125, %c0_126], %198 {strides = array<i32>} : memref<1x8x32xf32, #tpu.memory_space<vmem>>, vector<1x8x32xf32>,
    } else {
    }
    return
  }
  func.func @transform_0(%arg0: i32, %arg1: i32, %arg2: i32) -> (i32, i32, i32) {
    %c0_i32 = arith.constant 0 : i32
    %c0_i32_0 = arith.constant 0 : i32
    return %arg0, %arg1, %c0_i32 : i32, i32, i32
  }
  func.func @transform_1(%arg0: i32, %arg1: i32, %arg2: i32) -> (i32, i32, i32) {
    %c0_i32 = arith.constant 0 : i32
    %c0_i32_0 = arith.constant 0 : i32
    return %arg0, %arg2, %c0_i32 : i32, i32, i32
  }
  func.func @transform_2(%arg0: i32, %arg1: i32, %arg2: i32) -> (i32, i32) {
    %c0_i32 = arith.constant 0 : i32
    %c0_i32_0 = arith.constant 0 : i32
    %c0_i32_1 = arith.constant 0 : i32
    return %c0_i32, %c0_i32_0 : i32, i32
  }
  func.func @transform_3(%arg0: i32, %arg1: i32, %arg2: i32) -> (i32, i32) {
    %c0_i32 = arith.constant 0 : i32
    %c0_i32_0 = arith.constant 0 : i32
    %c0_i32_1 = arith.constant 0 : i32
    return %c0_i32, %c0_i32_0 : i32, i32
  }
  func.func @transform_4(%arg0: i32, %arg1: i32, %arg2: i32) -> (i32, i32) {
    %c0_i32 = arith.constant 0 : i32
    %c0_i32_0 = arith.constant 0 : i32
    %c0_i32_1 = arith.constant 0 : i32
    return %c0_i32, %c0_i32_0 : i32, i32
  }
  func.func @transform_5(%arg0: i32, %arg1: i32, %arg2: i32) -> (i32, i32) {
    %c0_i32 = arith.constant 0 : i32
    %c0_i32_0 = arith.constant 0 : i32
    %c0_i32_1 = arith.constant 0 : i32
    return %c0_i32, %c0_i32_0 : i32, i32
  }
  func.func @transform_6(%arg0: i32, %arg1: i32, %arg2: i32) -> (i32, i32, i32) {
    %c0_i32 = arith.constant 0 : i32
    %c0_i32_0 = arith.constant 0 : i32
    return %arg0, %arg1, %c0_i32 : i32, i32, i32
  }
}

</mosaic_0001>

<llo_original>
// kernel: tpu_custom_call.1
$region0: #{tpu_custom_call.1}
  #allocation0 [shape = 'u32[]', space=smem, size = 0x4, offset = 0x4, fixed_abs, tag = 'smem constant byte address 0x4 - core index']
  #allocation1 [shape = 'u32[144,128]{1,0:T(1,128)}', space=vmem, size = 0x12000, scoped, tag = 'internal scratch']
  #allocation2 [shape = 'bf16[8,512]{1,0:T(8,128)(2,1)}', space=vmem, size = 0x2000, scoped, tag = 'scratch operand']
  #allocation3 [shape = 'f32[4,8,1]{2,1,0:T(8,128)}', space=vmem, size = 0x4000, scoped, tag = 'scratch operand']
  #allocation4 [shape = 'f32[4,8,1]{2,1,0:T(8,128)}', space=vmem, size = 0x4000, scoped, tag = 'scratch operand']
  #allocation5 [shape = 'f32[4,8,128]{2,1,0:T(8,128)}', space=vmem, size = 0x4000, scoped, tag = 'scratch operand']
  %s0 = inlined_call_operand.vmem [shape: f32[2,8,32], index: 0, kind: input, shape index: {}]
  %s1 = inlined_call_operand.vmem [shape: bf16[2,8,1024], index: 1, kind: input, shape index: {}]
  %s2 = inlined_call_operand.vmem [shape: bf16[32,512], index: 2, kind: input, shape index: {}]
  %s3 = inlined_call_operand.vmem [shape: f32[1,512], index: 3, kind: input, shape index: {}]
  %s4 = inlined_call_operand.vmem [shape: bf16[512,32], index: 4, kind: input, shape index: {}]
  %s5 = inlined_call_operand.vmem [shape: f32[1,32], index: 5, kind: input, shape index: {}]
  %s6 = inlined_call_operand.hbm [shape: f32[2,8,32], index: 6, kind: output, shape index: {}]
  %s7 = sld [smem:[#allocation0]]
  $region65: #{tpu_custom_call.1} parent=0
    _
  %s9 = ssub.s32 1, %s7
  %s10 = scalar_select 0, %s9, %s7
  $region1: #{tpu_custom_call.1} parent=0
    #allocation6 [shape = 'u8[8192]{0}', space=vmem, size = 0x2000, scoped, tag = 'output window, operand 0']
    #allocation7 [shape = 's32[2]{0}', space=sflag, size = 0x8, scoped, tag = 'scoped memory for tpu_custom_call.1']
    %11 = vsyncpa [#allocation7], 0
    %s12 = scalar_lea.sflag [#allocation7], 1
    %13 = vsyncpa %s12, 0
    loop: start=0, step=1, limit=4
    $region2: #{tpu_custom_call.1} parent=1 // loop_pre_header
      _
    $region3: #{tpu_custom_call.1} parent=1 // loop_header
      %s15 = sphi 0, %s19
      %p16 = scmp.ge.s32.totalorder %s15, 4
      %s22 = sphi 0, %s41
      %s23 = sphi 0, %s37
      %s24 = sphi 0, %s33
      %s25 = sphi 0, %s22
      %s26 = sphi 0, %s23
      %s27 = sphi 0, %s24
      %s28 = sphi 0, %s25
      %s29 = sphi 0, %s26
      %s30 = sphi 0, %s27
      %s46 = sphi 0, %s48
      %s49 = sphi 0, %s46
      %s50 = sphi 0, %s49
      %s66 = sphi 0, %s50
      %s74 = sphi 0, %s76
      %s77 = sphi 0, %s74
      %s78 = sphi 0, %s77
      %s94 = sphi 0, %s78
      %s98 = sphi 0, %s98
      %s100 = sphi 0, %s98
      %s101 = sphi 0, %s100
      %s115 = sphi 0, %s101
      %s119 = sphi 0, %s119
      %s121 = sphi 0, %s119
      %s122 = sphi 0, %s121
      %s136 = sphi 0, %s122
      %s140 = sphi 0, %s140
      %s142 = sphi 0, %s140
      %s143 = sphi 0, %s142
      %s157 = sphi 0, %s143
      %s161 = sphi 0, %s161
      %s163 = sphi 0, %s161
      %s164 = sphi 0, %s163
      %s178 = sphi 0, %s164
      %s186 = sphi 0, %s188
      %s189 = sphi 0, %s186
      %s190 = sphi 0, %s189
      %s206 = sphi 0, %s190
    $region4: #{tpu_custom_call.1} parent=1 // loop_header_branch
      %18 = sbr.rel (%p16) target = $region8
    $region5: #{tpu_custom_call.1} parent=1 // loop_body
      %s20 = ssub.s32 %s15, 1
      %s21 = ssub.s32 %s15, 2
      %s31 = sadd.s32 1, %s24
      %p32 = scmp.ge.s32.totalorder %s31, 1
      %s33 = scalar_select %p32, 0, %s31
      %s34 = sadd.s32 1, %s23
      %s35 = scalar_select %p32, %s34, %s23
      %p36 = scmp.ge.s32.totalorder %s35, 1
      %s37 = scalar_select %p36, 0, %s35
      %s38 = sadd.s32 1, %s22
      %s39 = scalar_select %p36, %s38, %s22
      %p40 = scmp.ge.s32.totalorder %s39, 2
      %s41 = scalar_select %p40, 0, %s39
      %s42 = ssub.s32 %s22, %s41
      %s43 = ssub.s32 %s23, %s37
      %s44 = sor.u32 %s42, %s43
      %p45 = scmp.eq.s32.totalorder %s44, 0
      %s47 = sadd.s32 %s46, 1
      %s48 = scalar_select %p45, %s46, %s47
      %p51 = pneg %p45
      %p52 = scmp.eq.s32.totalorder %s15, 1
      %p53 = por %p51, %p52
      %p54 = scmp.ne.s32.totalorder %s46, %s49
      %p55 = scmp.eq.s32.totalorder %s15, 0
      %p56 = por %p54, %p55
      %p57 = scmp.ne.s32.totalorder %s46, %s49
      %p58 = scmp.eq.s32.totalorder %s20, 1
      %p59 = por %p57, %p58
      %p60 = scmp.ne.s32.totalorder %s49, %s50
      %p61 = scmp.eq.s32.totalorder %s20, 0
      %p62 = por %p60, %p61
      %p63 = scmp.ne.s32.totalorder %s49, %s50
      %p64 = scmp.eq.s32.totalorder %s21, 1
      %p65 = por %p63, %p64
      %p67 = scmp.ne.s32.totalorder %s50, %s66
      %p68 = scmp.eq.s32.totalorder %s21, 0
      %p69 = por %p67, %p68
      %s70 = ssub.s32 %s22, %s41
      %s71 = ssub.s32 %s24, %s33
      %s72 = sor.u32 %s70, %s71
      %p73 = scmp.eq.s32.totalorder %s72, 0
      %s75 = sadd.s32 %s74, 1
      %s76 = scalar_select %p73, %s74, %s75
      %p79 = pneg %p73
      %p80 = scmp.eq.s32.totalorder %s15, 1
      %p81 = por %p79, %p80
      %p82 = scmp.ne.s32.totalorder %s74, %s77
      %p83 = scmp.eq.s32.totalorder %s15, 0
      %p84 = por %p82, %p83
      %p85 = scmp.ne.s32.totalorder %s74, %s77
      %p86 = scmp.eq.s32.totalorder %s20, 1
      %p87 = por %p85, %p86
      %p88 = scmp.ne.s32.totalorder %s77, %s78
      %p89 = scmp.eq.s32.totalorder %s20, 0
      %p90 = por %p88, %p89
      %p91 = scmp.ne.s32.totalorder %s77, %s78
      %p92 = scmp.eq.s32.totalorder %s21, 1
      %p93 = por %p91, %p92
      %p95 = scmp.ne.s32.totalorder %s78, %s94
      %p96 = scmp.eq.s32.totalorder %s21, 0
      %p97 = por %p95, %p96
      %s99 = sadd.s32 %s98, 1
      %p102 = scmp.eq.s32.totalorder %s15, 1
      %p103 = scmp.ne.s32.totalorder %s98, %s100
      %p104 = scmp.eq.s32.totalorder %s15, 0
      %p105 = por %p103, %p104
      %p106 = scmp.ne.s32.totalorder %s98, %s100
      %p107 = scmp.eq.s32.totalorder %s20, 1
      %p108 = por %p106, %p107
      %p109 = scmp.ne.s32.totalorder %s100, %s101
      %p110 = scmp.eq.s32.totalorder %s20, 0
      %p111 = por %p109, %p110
      %p112 = scmp.ne.s32.totalorder %s100, %s101
      %p113 = scmp.eq.s32.totalorder %s21, 1
      %p114 = por %p112, %p113
      %p116 = scmp.ne.s32.totalorder %s101, %s115
      %p117 = scmp.eq.s32.totalorder %s21, 0
      %p118 = por %p116, %p117
      %s120 = sadd.s32 %s119, 1
      %p123 = scmp.eq.s32.totalorder %s15, 1
      %p124 = scmp.ne.s32.totalorder %s119, %s121
      %p125 = scmp.eq.s32.totalorder %s15, 0
      %p126 = por %p124, %p125
      %p127 = scmp.ne.s32.totalorder %s119, %s121
      %p128 = scmp.eq.s32.totalorder %s20, 1
      %p129 = por %p127, %p128
      %p130 = scmp.ne.s32.totalorder %s121, %s122
      %p131 = scmp.eq.s32.totalorder %s20, 0
      %p132 = por %p130, %p131
      %p133 = scmp.ne.s32.totalorder %s121, %s122
      %p134 = scmp.eq.s32.totalorder %s21, 1
      %p135 = por %p133, %p134
      %p137 = scmp.ne.s32.totalorder %s122, %s136
      %p138 = scmp.eq.s32.totalorder %s21, 0
      %p139 = por %p137, %p138
      %s141 = sadd.s32 %s140, 1
      %p144 = scmp.eq.s32.totalorder %s15, 1
      %p145 = scmp.ne.s32.totalorder %s140, %s142
      %p146 = scmp.eq.s32.totalorder %s15, 0
      %p147 = por %p145, %p146
      %p148 = scmp.ne.s32.totalorder %s140, %s142
      %p149 = scmp.eq.s32.totalorder %s20, 1
      %p150 = por %p148, %p149
      %p151 = scmp.ne.s32.totalorder %s142, %s143
      %p152 = scmp.eq.s32.totalorder %s20, 0
      %p153 = por %p151, %p152
      %p154 = scmp.ne.s32.totalorder %s142, %s143
      %p155 = scmp.eq.s32.totalorder %s21, 1
      %p156 = por %p154, %p155
      %p158 = scmp.ne.s32.totalorder %s143, %s157
      %p159 = scmp.eq.s32.totalorder %s21, 0
      %p160 = por %p158, %p159
      %s162 = sadd.s32 %s161, 1
      %p165 = scmp.eq.s32.totalorder %s15, 1
      %p166 = scmp.ne.s32.totalorder %s161, %s163
      %p167 = scmp.eq.s32.totalorder %s15, 0
      %p168 = por %p166, %p167
      %p169 = scmp.ne.s32.totalorder %s161, %s163
      %p170 = scmp.eq.s32.totalorder %s20, 1
      %p171 = por %p169, %p170
      %p172 = scmp.ne.s32.totalorder %s163, %s164
      %p173 = scmp.eq.s32.totalorder %s20, 0
      %p174 = por %p172, %p173
      %p175 = scmp.ne.s32.totalorder %s163, %s164
      %p176 = scmp.eq.s32.totalorder %s21, 1
      %p177 = por %p175, %p176
      %p179 = scmp.ne.s32.totalorder %s164, %s178
      %p180 = scmp.eq.s32.totalorder %s21, 0
      %p181 = por %p179, %p180
      %s182 = ssub.s32 %s22, %s41
      %s183 = ssub.s32 %s23, %s37
      %s184 = sor.u32 %s182, %s183
      %p185 = scmp.eq.s32.totalorder %s184, 0
      %s187 = sadd.s32 %s186, 1
      %s188 = scalar_select %p185, %s186, %s187
      %p191 = pneg %p185
      %p192 = scmp.eq.s32.totalorder %s15, 1
      %p193 = por %p191, %p192
      %p194 = scmp.ne.s32.totalorder %s186, %s189
      %p195 = scmp.eq.s32.totalorder %s15, 0
      %p196 = por %p194, %p195
      %p197 = scmp.ne.s32.totalorder %s186, %s189
      %p198 = scmp.eq.s32.totalorder %s20, 1
      %p199 = por %p197, %p198
      %p200 = scmp.ne.s32.totalorder %s189, %s190
      %p201 = scmp.eq.s32.totalorder %s20, 0
      %p202 = por %p200, %p201
      %p203 = scmp.ne.s32.totalorder %s189, %s190
      %p204 = scmp.eq.s32.totalorder %s21, 1
      %p205 = por %p203, %p204
      %p207 = scmp.ne.s32.totalorder %s190, %s206
      %p208 = scmp.eq.s32.totalorder %s21, 0
      %p209 = por %p207, %p208
      %p210 = scmp.le.s32.totalorder 1, %s15
      %p211 = scmp.lt.s32.totalorder %s15, 3
      %p212 = pnand %p210, %p211
      %p213 = pneg %p212
      // Predicated region
      $region9: #{tpu_custom_call.1} parent=5 // pred_check
        _
      $region10: #{tpu_custom_call.1} parent=5 // pred_check_branch
        %215 = sbr.rel (%p212) target = $region12
      $region11: #{tpu_custom_call.1} parent=5 // pred_region
        %s216 = ssub.s32 %s15, 1
        // Predicated region
        $region13: #{tpu_custom_call.1} parent=11 // pred_check
          %p217 = pneg %p111
        $region14: #{tpu_custom_call.1} parent=11 // pred_check_branch
          %219 = sbr.rel (%p217) target = $region16
        $region15: #{tpu_custom_call.1} parent=11 // pred_region
          _
        $region16: #{tpu_custom_call.1} parent=11 // pred_fallthru
          _
        // Predicated region
        $region17: #{tpu_custom_call.1} parent=11 // pred_check
          %p220 = pneg %p132
        $region18: #{tpu_custom_call.1} parent=11 // pred_check_branch
          %222 = sbr.rel (%p220) target = $region20
        $region19: #{tpu_custom_call.1} parent=11 // pred_region
          _
        $region20: #{tpu_custom_call.1} parent=11 // pred_fallthru
          _
        // Predicated region
        $region21: #{tpu_custom_call.1} parent=11 // pred_check
          %p223 = pneg %p153
        $region22: #{tpu_custom_call.1} parent=11 // pred_check_branch
          %225 = sbr.rel (%p223) target = $region24
        $region23: #{tpu_custom_call.1} parent=11 // pred_region
          _
        $region24: #{tpu_custom_call.1} parent=11 // pred_fallthru
          _
        // Predicated region
        $region25: #{tpu_custom_call.1} parent=11 // pred_check
          %p226 = pneg %p174
        $region26: #{tpu_custom_call.1} parent=11 // pred_check_branch
          %228 = sbr.rel (%p226) target = $region28
        $region27: #{tpu_custom_call.1} parent=11 // pred_region
          _
        $region28: #{tpu_custom_call.1} parent=11 // pred_fallthru
          _
      $region12: #{tpu_custom_call.1} parent=5 // pred_fallthru
        _
      %p229 = scmp.lt.s32.totalorder %s15, 2
      // Predicated region
      $region29: #{tpu_custom_call.1} parent=5 // pred_check
        %p230 = pneg %p229
      $region30: #{tpu_custom_call.1} parent=5 // pred_check_branch
        %232 = sbr.rel (%p230) target = $region32
      $region31: #{tpu_custom_call.1} parent=5 // pred_region
        // Predicated region
        $region33: #{tpu_custom_call.1} parent=31 // pred_check
          %p233 = pneg %p56
        $region34: #{tpu_custom_call.1} parent=31 // pred_check_branch
          %235 = sbr.rel (%p233) target = $region36
        $region35: #{tpu_custom_call.1} parent=31 // pred_region
          %p236 = scmp.lt.s32.totalorder %s22, 1
          %s237 = scalar_select %p236, %s22, 1
          %p238 = scmp.lt.s32.totalorder %s23, 0
          %s239 = scalar_select %p238, %s23, 0
          %s240 = sadd.s32 %s239, %s237
          %s241 = smul.addr %s240, 8
          %s242 = scalar_lea.vmem %s0, %s241
        $region36: #{tpu_custom_call.1} parent=31 // pred_fallthru
          _
        // Predicated region
        $region37: #{tpu_custom_call.1} parent=31 // pred_check
          %p243 = pneg %p84
        $region38: #{tpu_custom_call.1} parent=31 // pred_check_branch
          %245 = sbr.rel (%p243) target = $region40
        $region39: #{tpu_custom_call.1} parent=31 // pred_region
          %p246 = scmp.lt.s32.totalorder %s22, 1
          %s247 = scalar_select %p246, %s22, 1
          %p248 = scmp.lt.s32.totalorder %s24, 0
          %s249 = scalar_select %p248, %s24, 0
          %s250 = smul.addr %s249, 8
          %s251 = smul.addr %s247, 8
          %s252 = sadd.s32 %s250, %s251
          %s253 = smul.addr %s252, 4
          %s254 = scalar_lea.vmem %s1, %s253
        $region40: #{tpu_custom_call.1} parent=31 // pred_fallthru
          _
      $region32: #{tpu_custom_call.1} parent=5 // pred_fallthru
        _
      %p255 = scmp.le.s32.totalorder 1, %s15
      %p256 = scmp.lt.s32.totalorder %s15, 3
      %p257 = pnand %p255, %p256
      %p258 = pneg %p257
      // Predicated region
      $region41: #{tpu_custom_call.1} parent=5 // pred_check
        _
      $region42: #{tpu_custom_call.1} parent=5 // pred_check_branch
        %260 = sbr.rel (%p257) target = $region44
      $region43: #{tpu_custom_call.1} parent=5 // pred_region
        %s261 = ssub.s32 %s15, 1
        %p262 = scmp.lt.s32.totalorder %s25, 1
        %s263 = scalar_select %p262, %s25, 1
        %p264 = scmp.lt.s32.totalorder %s26, 0
        %s265 = scalar_select %p264, %s26, 0
        %s266 = sadd.s32 %s265, %s263
        %s267 = smul.addr %s266, 8
        %s268 = scalar_lea.vmem %s0, %s267
        %p269 = pneg %p62
        %p270 = pneg %p59
        %p271 = scmp.lt.s32.totalorder %s25, 1
        %s272 = scalar_select %p271, %s25, 1
        %p273 = scmp.lt.s32.totalorder %s27, 0
        %s274 = scalar_select %p273, %s27, 0
        %s275 = smul.addr %s274, 8
        %s276 = smul.addr %s272, 8
        %s277 = sadd.s32 %s275, %s276
        %s278 = smul.addr %s277, 4
        %s279 = scalar_lea.vmem %s1, %s278
        %p280 = pneg %p90
        %p281 = pneg %p87
        %p282 = pneg %p111
        %p283 = pneg %p108
        %p284 = pneg %p132
        %p285 = pneg %p129
        %p286 = pneg %p153
        %p287 = pneg %p150
        %p288 = pneg %p174
        %p289 = pneg %p171
        %p290 = pneg %p202
        %p291 = pneg %p199
        %s292 = sand.u32 %s189, 1
        %s293 = scalar_lea.sflag [#allocation7], %s292
        %s294 = sand.u32 %s189, 1
        %s295 = smul.addr %s294, 8
        %s296 = scalar_lea.vmem [#allocation6], %s295
        %p297 = scmp.lt.s32.totalorder %s25, 1
        %s298 = scalar_select %p297, %s25, 1
        %p299 = scmp.lt.s32.totalorder %s26, 0
        %s300 = scalar_select %p299, %s26, 0
        %s301 = sadd.s32 %s300, %s298
        %s302 = smul.addr %s301, 8
        %s303 = scalar_lea.vmem %s0, %s302
        %p304 = scmp.lt.s32.totalorder %s25, 1
        %s305 = scalar_select %p304, %s25, 1
        %p306 = scmp.lt.s32.totalorder %s27, 0
        %s307 = scalar_select %p306, %s27, 0
        %s308 = smul.addr %s307, 8
        %s309 = smul.addr %s305, 8
        %s310 = sadd.s32 %s308, %s309
        %s311 = smul.addr %s310, 4
        %s312 = scalar_lea.vmem %s1, %s311
        %p314 = scmp.eq.s32.totalorder %s27, 0
        // Predicated region
        $region45: #{tpu_custom_call.1} parent=43 // pred_check
          %p315 = pneg %p314
        $region46: #{tpu_custom_call.1} parent=43 // pred_check_branch
          %317 = sbr.rel (%p315) target = $region48
        $region47: #{tpu_custom_call.1} parent=43 // pred_region
          %vm318 = vcmask 7168
          %319 = vst.msk [vmem:[#allocation3] sm:$0xff] %vm318, -inf
          %320 = vst.msk [vmem:[#allocation3 + $0x8] sm:$0xff] %vm318, -inf
          %321 = vst.msk [vmem:[#allocation3 + $0x10] sm:$0xff] %vm318, -inf
          %322 = vst.msk [vmem:[#allocation3 + $0x18] sm:$0xff] %vm318, -inf
          %323 = vst.msk [vmem:[#allocation4] sm:$0xff] %vm318, 0.0
          %324 = vst.msk [vmem:[#allocation4 + $0x8] sm:$0xff] %vm318, 0.0
          %325 = vst.msk [vmem:[#allocation4 + $0x10] sm:$0xff] %vm318, 0.0
          %326 = vst.msk [vmem:[#allocation4 + $0x18] sm:$0xff] %vm318, 0.0
          %327 = vst [vmem:[#allocation5] sm:$0xff] 0.0
          %328 = vst [vmem:[#allocation5 + $0x8] sm:$0xff] 0.0
          %329 = vst [vmem:[#allocation5 + $0x10] sm:$0xff] 0.0
          %330 = vst [vmem:[#allocation5 + $0x18] sm:$0xff] 0.0
          %v331 = vld [vmem:[%s303] sm:$0xff]
          %vm332 = vcmask 261120
          %v333 = vsel %vm332, %v331, 0.0
          %334 = vadd.xlane.f32.xlu0 %v333
          %v335 = vpop.xlane.xlu0 %334
          %v336 = vrcp.pop 32.0
          %v337 = vmul.f32 %v335, %v336
          %v338 = vsub.f32 %v331, %v337
          %v339 = vmul.f32 %v338, %v338
          %v340 = vsel %vm332, %v339, 0.0
          %341 = vadd.xlane.f32.xlu0 %v340
          %v342 = vpop.xlane.xlu0 %341
          %v343 = vmul.f32 %v342, %v336
          %v344 = vadd.f32 %v343, 1e-05
          %v345 = vrsqrt.pop %v344
          %v346 = vmul.f32 %v338, %v345
          %v347 = vpack.c.bf16 %v346, %v346
          %v348 = vld [vmem:[%s2] sm:$0xff]
          %v349 = vld [vmem:[%s2 + $0x8] sm:$0xff]
          %v350 = vld [vmem:[%s2 + $0x10] sm:$0xff]
          %v351 = vld [vmem:[%s2 + $0x18] sm:$0xff]
          %v352 = vld [vmem:[%s2 + $0x20] sm:$0xff]
          %v353 = vld [vmem:[%s2 + $0x28] sm:$0xff]
          %v354 = vld [vmem:[%s2 + $0x30] sm:$0xff]
          %v355 = vld [vmem:[%s2 + $0x38] sm:$0xff]
          %v356 = vld [vmem:[%s3] sm:$0xf]
          %v358 = vlaneseq
          %v359 = vshrl.u32 %v358, 7
          %v360 = vsub.s32 0, %v359
          %v361 = vrot.slane %v356, %v360
          %v362 = vlaneseq
          %v363 = vshrl.u32 %v362, 7
          %v364 = vsub.s32 1, %v363
          %v365 = vrot.slane %v356, %v364
          %v366 = vlaneseq
          %v367 = vshrl.u32 %v366, 7
          %v368 = vsub.s32 2, %v367
          %v369 = vrot.slane %v356, %v368
          %v370 = vlaneseq
          %v371 = vshrl.u32 %v370, 7
          %v372 = vsub.s32 3, %v371
          %v373 = vrot.slane %v356, %v372
          %v386 = vunpack.c.l.b16 %v348
          %v387 = vunpack.c.h.b16 %v348
          %v388 = vunpack.c.l.b16 %v349
          %v389 = vunpack.c.h.b16 %v349
          %v390 = vunpack.c.l.b16 %v350
          %v391 = vunpack.c.h.b16 %v350
          %v392 = vunpack.c.l.b16 %v351
          %v393 = vunpack.c.h.b16 %v351
          %v394 = vunpack.c.l.b16 %v352
          %v395 = vunpack.c.h.b16 %v352
          %v396 = vunpack.c.l.b16 %v353
          %v397 = vunpack.c.h.b16 %v353
          %v398 = vunpack.c.l.b16 %v354
          %v399 = vunpack.c.h.b16 %v354
          %v400 = vunpack.c.l.b16 %v355
          %v401 = vunpack.c.h.b16 %v355
          %v402 = vpack.c.b16 %v390, %v386
          %v403 = vpack.c.b16 %v391, %v387
          %v404 = vpack.c.b16 %v392, %v388
          %v405 = vpack.c.b16 %v393, %v389
          %v406 = vpack.c.b16 %v398, %v394
          %v407 = vpack.c.b16 %v399, %v395
          %v408 = vpack.c.b16 %v400, %v396
          %v409 = vpack.c.b16 %v401, %v397
          %v419 = vsel %vm332, %v347, 0
          %421 = vmatprep.subr.bf16.mxu0 %v403
          %422 = vmatpush1.bf16.msra.mxu0 %v402
          %423 = vmatprep.subr.bf16.mxu0 %v407
          %424 = vmatpush1.bf16.msra.mxu0 %v406
          %425 = vmatprep.subr.bf16.mxu0 0
          %426 = vmatpush1.bf16.msra.mxu0 0
          %427 = vmatprep.subr.bf16.mxu0 0
          %428 = vmatpush1.bf16.msra.mxu0 0
          %429 = vmatprep.subr.bf16.mxu0 0
          %430 = vmatpush1.bf16.msra.mxu0 0
          %431 = vmatprep.subr.bf16.mxu0 0
          %432 = vmatpush1.bf16.msra.mxu0 0
          %433 = vmatprep.subr.bf16.mxu0 0
          %434 = vmatpush1.bf16.msra.mxu0 0
          %435 = vmatprep.subr.bf16.mxu0 0
          %436 = vmatpush1.bf16.msra.mxu0 0
          %437 = vmatprep.subr.bf16.mxu0 0
          %438 = vmatpush1.bf16.msra.mxu0 0
          %439 = vmatprep.subr.bf16.mxu0 0
          %440 = vmatpush1.bf16.msra.mxu0 0
          %441 = vmatprep.subr.bf16.mxu0 0
          %442 = vmatpush1.bf16.msra.mxu0 0
          %443 = vmatprep.subr.bf16.mxu0 0
          %444 = vmatpush1.bf16.msra.mxu0 0
          %445 = vmatprep.subr.bf16.mxu0 0
          %446 = vmatpush1.bf16.msra.mxu0 0
          %447 = vmatprep.subr.bf16.mxu0 0
          %448 = vmatpush1.bf16.msra.mxu0 0
          %449 = vmatprep.subr.bf16.mxu0 0
          %450 = vmatpush1.bf16.msra.mxu0 0
          %451 = vmatprep.subr.bf16.mxu0 0
          %452 = vmatpush1.bf16.msra.mxu0 0
          %453 = vmatprep.mubr.bf16.mxu0 0
          %454 = vmatmul.mubr.bf16.gmra.mrb[0].mxu0 %v419
          %v455 = vpop.f32.mrb[0].mxu0
          %v456 = vadd.f32 %v361, %v455
          %v457 = vpop.f32.mrb[0].mxu0
          %v458 = vadd.f32 %v365, %v457
          %v459 = vpop.f32.mrb[0].mxu0
          %v460 = vpop.f32.mrb[0].mxu0
          %461 = vdwg.mxu0
          %462 = vmatprep.subr.bf16.mxu0 %v405
          %463 = vmatpush1.bf16.msra.mxu0 %v404
          %464 = vmatprep.subr.bf16.mxu0 %v409
          %465 = vmatpush1.bf16.msra.mxu0 %v408
          %466 = vmatprep.subr.bf16.mxu0 0
          %467 = vmatpush1.bf16.msra.mxu0 0
          %468 = vmatprep.subr.bf16.mxu0 0
          %469 = vmatpush1.bf16.msra.mxu0 0
          %470 = vmatprep.subr.bf16.mxu0 0
          %471 = vmatpush1.bf16.msra.mxu0 0
          %472 = vmatprep.subr.bf16.mxu0 0
          %473 = vmatpush1.bf16.msra.mxu0 0
          %474 = vmatprep.subr.bf16.mxu0 0
          %475 = vmatpush1.bf16.msra.mxu0 0
          %476 = vmatprep.subr.bf16.mxu0 0
          %477 = vmatpush1.bf16.msra.mxu0 0
          %478 = vmatprep.subr.bf16.mxu0 0
          %479 = vmatpush1.bf16.msra.mxu0 0
          %480 = vmatprep.subr.bf16.mxu0 0
          %481 = vmatpush1.bf16.msra.mxu0 0
          %482 = vmatprep.subr.bf16.mxu0 0
          %483 = vmatpush1.bf16.msra.mxu0 0
          %484 = vmatprep.subr.bf16.mxu0 0
          %485 = vmatpush1.bf16.msra.mxu0 0
          %486 = vmatprep.subr.bf16.mxu0 0
          %487 = vmatpush1.bf16.msra.mxu0 0
          %488 = vmatprep.subr.bf16.mxu0 0
          %489 = vmatpush1.bf16.msra.mxu0 0
          %490 = vmatprep.subr.bf16.mxu0 0
          %491 = vmatpush1.bf16.msra.mxu0 0
          %492 = vmatprep.subr.bf16.mxu0 0
          %493 = vmatpush1.bf16.msra.mxu0 0
          %494 = vmatprep.mubr.bf16.mxu0 0
          %495 = vmatmul.mubr.bf16.gmra.mrb[0].mxu0 %v419
          %v496 = vpop.f32.mrb[0].mxu0
          %v497 = vadd.f32 %v369, %v496
          %v498 = vpop.f32.mrb[0].mxu0
          %v499 = vadd.f32 %v373, %v498
          %v500 = vpop.f32.mrb[0].mxu0
          %v501 = vpop.f32.mrb[0].mxu0
          %502 = vdwg.mxu0
          %v503 = vpack.c.bf16 %v456, %v456
          %v504 = vpack.c.bf16 %v458, %v458
          %v505 = vpack.c.bf16 %v497, %v497
          %v506 = vpack.c.bf16 %v499, %v499
          %v511 = vunpack.c.l.b16 %v503
          %v512 = vunpack.c.l.b16 %v504
          %v513 = vunpack.c.l.b16 %v505
          %v514 = vunpack.c.l.b16 %v506
          %v515 = vpack.c.b16 %v512, %v511
          %v516 = vpack.c.b16 %v514, %v513
          %519 = vst [vmem:[#allocation2] sm:$0xff] %v515
          %520 = vst [vmem:[#allocation2 + $0x8] sm:$0xff] %v516
        $region48: #{tpu_custom_call.1} parent=43 // pred_fallthru
          _
        %v521 = vld [vmem:[%s312] sm:$0xff]
        %v522 = vld [vmem:[%s312 + $0x8] sm:$0xff]
        %v523 = vld [vmem:[%s312 + $0x10] sm:$0xff]
        %v524 = vld [vmem:[%s312 + $0x18] sm:$0xff]
        %v525 = vld [vmem:[#allocation2] sm:$0xff]
        %v526 = vld [vmem:[#allocation2 + $0x8] sm:$0xff]
        %527 = vmatprep.subr.bf16.mxu0 0
        %528 = vmatpush1.bf16.xpose.msra.mxu0 %v521
        %529 = vmatprep.subr.bf16.mxu0 0
        %530 = vmatpush1.bf16.xpose.msra.mxu0 0
        %531 = vmatprep.subr.bf16.mxu0 0
        %532 = vmatpush1.bf16.xpose.msra.mxu0 0
        %533 = vmatprep.subr.bf16.mxu0 0
        %534 = vmatpush1.bf16.xpose.msra.mxu0 0
        %535 = vmatprep.subr.bf16.mxu0 0
        %536 = vmatpush1.bf16.xpose.msra.mxu0 0
        %537 = vmatprep.subr.bf16.mxu0 0
        %538 = vmatpush1.bf16.xpose.msra.mxu0 0
        %539 = vmatprep.subr.bf16.mxu0 0
        %540 = vmatpush1.bf16.xpose.msra.mxu0 0
        %541 = vmatprep.subr.bf16.mxu0 0
        %542 = vmatpush1.bf16.xpose.msra.mxu0 0
        %543 = vmatprep.subr.bf16.mxu0 0
        %544 = vmatpush1.bf16.xpose.msra.mxu0 0
        %545 = vmatprep.subr.bf16.mxu0 0
        %546 = vmatpush1.bf16.xpose.msra.mxu0 0
        %547 = vmatprep.subr.bf16.mxu0 0
        %548 = vmatpush1.bf16.xpose.msra.mxu0 0
        %549 = vmatprep.subr.bf16.mxu0 0
        %550 = vmatpush1.bf16.xpose.msra.mxu0 0
        %551 = vmatprep.subr.bf16.mxu0 0
        %552 = vmatpush1.bf16.xpose.msra.mxu0 0
        %553 = vmatprep.subr.bf16.mxu0 0
        %554 = vmatpush1.bf16.xpose.msra.mxu0 0
        %555 = vmatprep.subr.bf16.mxu0 0
        %556 = vmatpush1.bf16.xpose.msra.mxu0 0
        %557 = vmatprep.subr.bf16.mxu0 0
        %558 = vmatpush1.bf16.xpose.msra.mxu0 0
        %559 = vmatprep.mubr.bf16.mxu0 0
        %560 = vmatmul.mubr.bf16.gmra.mrb[0].mxu0 %v525
        %v561 = vpop.f32.mrb[0].mxu0
        %v562 = vadd.f32 0.0, %v561
        %v563 = vpop.f32.mrb[0].mxu0
        %v564 = vpop.f32.mrb[0].mxu0
        %v565 = vpop.f32.mrb[0].mxu0
        %566 = vdwg.mxu0
        %v567 = vld [vmem:[#allocation3] sm:$0xff]
        %vm568 = vcmask 64512
        %v569 = vsel %vm568, %v562, -inf
        %570 = vmax.xlane.f32.xlu0 %v569
        %v571 = vpop.xlane.xlu0 %570
        %v572 = vmax.f32 %v567, %v571
        %v573 = vsub.f32 %v567, %v572
        %v574 = vmul.f32 %v573, 1.442695
        %v575 = vpow.pop %v574
        %577 = vset.pattern.permute.xlu0 0
        %578 = vperm.xlu0 %577, %v572
        %v579 = vpop.permute.xlu0 %578
        %v581 = vsub.f32 %v562, %v579
        %v582 = vmul.f32 %v581, 1.442695
        %v583 = vpow.pop %v582
        %v584 = vld [vmem:[#allocation4] sm:$0xff]
        %v585 = vmul.f32 %v575, %v584
        %v586 = vsel %vm568, %v583, 0.0
        %587 = vadd.xlane.f32.xlu0 %v586
        %v588 = vpop.xlane.xlu0 %587
        %v589 = vadd.f32 %v585, %v588
        %vm590 = vcmask 7168
        %591 = vst.msk [vmem:[#allocation4] sm:$0xff] %vm590, %v589
        %v592 = vld [vmem:[#allocation5] sm:$0xff]
        %594 = vset.pattern.permute.xlu0 0
        %595 = vperm.xlu0 %594, %v575
        %v596 = vpop.permute.xlu0 %595
        %v598 = vmul.f32 %v596, %v592
        %v599 = vpack.c.bf16 %v583, %v583
        %v601 = vsel %vm568, %v599, 0
        %vm603 = vcmask 1043456
        %v605 = vsel %vm603, %v523, 0
        %607 = vmatprep.subr.bf16.mxu0 0
        %608 = vmatpush1.bf16.msra.mxu0 %v605
        %609 = vmatprep.subr.bf16.mxu0 0
        %610 = vmatpush1.bf16.msra.mxu0 0
        %611 = vmatprep.subr.bf16.mxu0 0
        %612 = vmatpush1.bf16.msra.mxu0 0
        %613 = vmatprep.subr.bf16.mxu0 0
        %614 = vmatpush1.bf16.msra.mxu0 0
        %615 = vmatprep.subr.bf16.mxu0 0
        %616 = vmatpush1.bf16.msra.mxu0 0
        %617 = vmatprep.subr.bf16.mxu0 0
        %618 = vmatpush1.bf16.msra.mxu0 0
        %619 = vmatprep.subr.bf16.mxu0 0
        %620 = vmatpush1.bf16.msra.mxu0 0
        %621 = vmatprep.subr.bf16.mxu0 0
        %622 = vmatpush1.bf16.msra.mxu0 0
        %623 = vmatprep.subr.bf16.mxu0 0
        %624 = vmatpush1.bf16.msra.mxu0 0
        %625 = vmatprep.subr.bf16.mxu0 0
        %626 = vmatpush1.bf16.msra.mxu0 0
        %627 = vmatprep.subr.bf16.mxu0 0
        %628 = vmatpush1.bf16.msra.mxu0 0
        %629 = vmatprep.subr.bf16.mxu0 0
        %630 = vmatpush1.bf16.msra.mxu0 0
        %631 = vmatprep.subr.bf16.mxu0 0
        %632 = vmatpush1.bf16.msra.mxu0 0
        %633 = vmatprep.subr.bf16.mxu0 0
        %634 = vmatpush1.bf16.msra.mxu0 0
        %635 = vmatprep.subr.bf16.mxu0 0
        %636 = vmatpush1.bf16.msra.mxu0 0
        %637 = vmatprep.subr.bf16.mxu0 0
        %638 = vmatpush1.bf16.msra.mxu0 0
        %639 = vmatprep.mubr.bf16.mxu0 0
        %640 = vmatmul.mubr.bf16.gmra.mrb[0].mxu0 %v601
        %v641 = vpop.f32.mrb[0].mxu0
        %v642 = vadd.f32 0.0, %v641
        %v643 = vpop.f32.mrb[0].mxu0
        %v644 = vpop.f32.mrb[0].mxu0
        %v645 = vpop.f32.mrb[0].mxu0
        %646 = vdwg.mxu0
        %v647 = vadd.f32 %v598, %v642
        %648 = vst [vmem:[#allocation5] sm:$0xff] %v647
        %649 = vst.msk [vmem:[#allocation3] sm:$0xff] %vm590, %v572
        %v651 = vunpack.c.h.b16 %v525
        %v652 = vpack.c.b16 %v651, %v651
        %v655 = vunpack.c.h.b16 %v521
        %v656 = vpack.c.b16 %v655, %v655
        %658 = vmatprep.subr.bf16.mxu0 0
        %659 = vmatpush1.bf16.xpose.msra.mxu0 %v656
        %660 = vmatprep.subr.bf16.mxu0 0
        %661 = vmatpush1.bf16.xpose.msra.mxu0 0
        %662 = vmatprep.subr.bf16.mxu0 0
        %663 = vmatpush1.bf16.xpose.msra.mxu0 0
        %664 = vmatprep.subr.bf16.mxu0 0
        %665 = vmatpush1.bf16.xpose.msra.mxu0 0
        %666 = vmatprep.subr.bf16.mxu0 0
        %667 = vmatpush1.bf16.xpose.msra.mxu0 0
        %668 = vmatprep.subr.bf16.mxu0 0
        %669 = vmatpush1.bf16.xpose.msra.mxu0 0
        %670 = vmatprep.subr.bf16.mxu0 0
        %671 = vmatpush1.bf16.xpose.msra.mxu0 0
        %672 = vmatprep.subr.bf16.mxu0 0
        %673 = vmatpush1.bf16.xpose.msra.mxu0 0
        %674 = vmatprep.subr.bf16.mxu0 0
        %675 = vmatpush1.bf16.xpose.msra.mxu0 0
        %676 = vmatprep.subr.bf16.mxu0 0
        %677 = vmatpush1.bf16.xpose.msra.mxu0 0
        %678 = vmatprep.subr.bf16.mxu0 0
        %679 = vmatpush1.bf16.xpose.msra.mxu0 0
        %680 = vmatprep.subr.bf16.mxu0 0
        %681 = vmatpush1.bf16.xpose.msra.mxu0 0
        %682 = vmatprep.subr.bf16.mxu0 0
        %683 = vmatpush1.bf16.xpose.msra.mxu0 0
        %684 = vmatprep.subr.bf16.mxu0 0
        %685 = vmatpush1.bf16.xpose.msra.mxu0 0
        %686 = vmatprep.subr.bf16.mxu0 0
        %687 = vmatpush1.bf16.xpose.msra.mxu0 0
        %688 = vmatprep.subr.bf16.mxu0 0
        %689 = vmatpush1.bf16.xpose.msra.mxu0 0
        %690 = vmatprep.mubr.bf16.mxu0 0
        %691 = vmatmul.mubr.bf16.gmra.mrb[0].mxu0 %v652
        %v692 = vpop.f32.mrb[0].mxu0
        %v693 = vadd.f32 0.0, %v692
        %v694 = vpop.f32.mrb[0].mxu0
        %v695 = vpop.f32.mrb[0].mxu0
        %v696 = vpop.f32.mrb[0].mxu0
        %697 = vdwg.mxu0
        %s698 = scalar_lea.vmem [#allocation3], 8
        %v699 = vld [vmem:[%s698] sm:$0xff]
        %v700 = vsel %vm568, %v693, -inf
        %701 = vmax.xlane.f32.xlu0 %v700
        %v702 = vpop.xlane.xlu0 %701
        %v703 = vmax.f32 %v699, %v702
        %v704 = vsub.f32 %v699, %v703
        %v705 = vmul.f32 %v704, 1.442695
        %v706 = vpow.pop %v705
        %708 = vset.pattern.permute.xlu0 0
        %709 = vperm.xlu0 %708, %v703
        %v710 = vpop.permute.xlu0 %709
        %v712 = vsub.f32 %v693, %v710
        %v713 = vmul.f32 %v712, 1.442695
        %v714 = vpow.pop %v713
        %s715 = scalar_lea.vmem [#allocation4], 8
        %v716 = vld [vmem:[%s715] sm:$0xff]
        %v717 = vmul.f32 %v706, %v716
        %v718 = vsel %vm568, %v714, 0.0
        %719 = vadd.xlane.f32.xlu0 %v718
        %v720 = vpop.xlane.xlu0 %719
        %v721 = vadd.f32 %v717, %v720
        %722 = vst.msk [vmem:[%s715] sm:$0xff] %vm590, %v721
        %s723 = scalar_lea.vmem [#allocation5], 8
        %v724 = vld [vmem:[%s723] sm:$0xff]
        %726 = vset.pattern.permute.xlu0 0
        %727 = vperm.xlu0 %726, %v706
        %v728 = vpop.permute.xlu0 %727
        %v730 = vmul.f32 %v728, %v724
        %v731 = vpack.c.bf16 %v714, %v714
        %v733 = vunpack.c.h.b16 %v523
        %v734 = vpack.c.b16 %v733, %v733
        %v736 = vsel %vm568, %v731, 0
        %v739 = vsel %vm603, %v734, 0
        %741 = vmatprep.subr.bf16.mxu0 0
        %742 = vmatpush1.bf16.msra.mxu0 %v739
        %743 = vmatprep.subr.bf16.mxu0 0
        %744 = vmatpush1.bf16.msra.mxu0 0
        %745 = vmatprep.subr.bf16.mxu0 0
        %746 = vmatpush1.bf16.msra.mxu0 0
        %747 = vmatprep.subr.bf16.mxu0 0
        %748 = vmatpush1.bf16.msra.mxu0 0
        %749 = vmatprep.subr.bf16.mxu0 0
        %750 = vmatpush1.bf16.msra.mxu0 0
        %751 = vmatprep.subr.bf16.mxu0 0
        %752 = vmatpush1.bf16.msra.mxu0 0
        %753 = vmatprep.subr.bf16.mxu0 0
        %754 = vmatpush1.bf16.msra.mxu0 0
        %755 = vmatprep.subr.bf16.mxu0 0
        %756 = vmatpush1.bf16.msra.mxu0 0
        %757 = vmatprep.subr.bf16.mxu0 0
        %758 = vmatpush1.bf16.msra.mxu0 0
        %759 = vmatprep.subr.bf16.mxu0 0
        %760 = vmatpush1.bf16.msra.mxu0 0
        %761 = vmatprep.subr.bf16.mxu0 0
        %762 = vmatpush1.bf16.msra.mxu0 0
        %763 = vmatprep.subr.bf16.mxu0 0
        %764 = vmatpush1.bf16.msra.mxu0 0
        %765 = vmatprep.subr.bf16.mxu0 0
        %766 = vmatpush1.bf16.msra.mxu0 0
        %767 = vmatprep.subr.bf16.mxu0 0
        %768 = vmatpush1.bf16.msra.mxu0 0
        %769 = vmatprep.subr.bf16.mxu0 0
        %770 = vmatpush1.bf16.msra.mxu0 0
        %771 = vmatprep.subr.bf16.mxu0 0
        %772 = vmatpush1.bf16.msra.mxu0 0
        %773 = vmatprep.mubr.bf16.mxu0 0
        %774 = vmatmul.mubr.bf16.gmra.mrb[0].mxu0 %v736
        %v775 = vpop.f32.mrb[0].mxu0
        %v776 = vadd.f32 0.0, %v775
        %v777 = vpop.f32.mrb[0].mxu0
        %v778 = vpop.f32.mrb[0].mxu0
        %v779 = vpop.f32.mrb[0].mxu0
        %780 = vdwg.mxu0
        %v781 = vadd.f32 %v730, %v776
        %782 = vst [vmem:[%s723] sm:$0xff] %v781
        %783 = vst.msk [vmem:[%s698] sm:$0xff] %vm590, %v703
        %784 = vmatprep.subr.bf16.mxu0 0
        %785 = vmatpush1.bf16.xpose.msra.mxu0 %v522
        %786 = vmatprep.subr.bf16.mxu0 0
        %787 = vmatpush1.bf16.xpose.msra.mxu0 0
        %788 = vmatprep.subr.bf16.mxu0 0
        %789 = vmatpush1.bf16.xpose.msra.mxu0 0
        %790 = vmatprep.subr.bf16.mxu0 0
        %791 = vmatpush1.bf16.xpose.msra.mxu0 0
        %792 = vmatprep.subr.bf16.mxu0 0
        %793 = vmatpush1.bf16.xpose.msra.mxu0 0
        %794 = vmatprep.subr.bf16.mxu0 0
        %795 = vmatpush1.bf16.xpose.msra.mxu0 0
        %796 = vmatprep.subr.bf16.mxu0 0
        %797 = vmatpush1.bf16.xpose.msra.mxu0 0
        %798 = vmatprep.subr.bf16.mxu0 0
        %799 = vmatpush1.bf16.xpose.msra.mxu0 0
        %800 = vmatprep.subr.bf16.mxu0 0
        %801 = vmatpush1.bf16.xpose.msra.mxu0 0
        %802 = vmatprep.subr.bf16.mxu0 0
        %803 = vmatpush1.bf16.xpose.msra.mxu0 0
        %804 = vmatprep.subr.bf16.mxu0 0
        %805 = vmatpush1.bf16.xpose.msra.mxu0 0
        %806 = vmatprep.subr.bf16.mxu0 0
        %807 = vmatpush1.bf16.xpose.msra.mxu0 0
        %808 = vmatprep.subr.bf16.mxu0 0
        %809 = vmatpush1.bf16.xpose.msra.mxu0 0
        %810 = vmatprep.subr.bf16.mxu0 0
        %811 = vmatpush1.bf16.xpose.msra.mxu0 0
        %812 = vmatprep.subr.bf16.mxu0 0
        %813 = vmatpush1.bf16.xpose.msra.mxu0 0
        %814 = vmatprep.subr.bf16.mxu0 0
        %815 = vmatpush1.bf16.xpose.msra.mxu0 0
        %816 = vmatprep.mubr.bf16.mxu0 0
        %817 = vmatmul.mubr.bf16.gmra.mrb[0].mxu0 %v526
        %v818 = vpop.f32.mrb[0].mxu0
        %v819 = vadd.f32 0.0, %v818
        %v820 = vpop.f32.mrb[0].mxu0
        %v821 = vpop.f32.mrb[0].mxu0
        %v822 = vpop.f32.mrb[0].mxu0
        %823 = vdwg.mxu0
        %s824 = scalar_lea.vmem [#allocation3], 16
        %v825 = vld [vmem:[%s824] sm:$0xff]
        %v826 = vsel %vm568, %v819, -inf
        %827 = vmax.xlane.f32.xlu0 %v826
        %v828 = vpop.xlane.xlu0 %827
        %v829 = vmax.f32 %v825, %v828
        %v830 = vsub.f32 %v825, %v829
        %v831 = vmul.f32 %v830, 1.442695
        %v832 = vpow.pop %v831
        %834 = vset.pattern.permute.xlu0 0
        %835 = vperm.xlu0 %834, %v829
        %v836 = vpop.permute.xlu0 %835
        %v838 = vsub.f32 %v819, %v836
        %v839 = vmul.f32 %v838, 1.442695
        %v840 = vpow.pop %v839
        %s841 = scalar_lea.vmem [#allocation4], 16
        %v842 = vld [vmem:[%s841] sm:$0xff]
        %v843 = vmul.f32 %v832, %v842
        %v844 = vsel %vm568, %v840, 0.0
        %845 = vadd.xlane.f32.xlu0 %v844
        %v846 = vpop.xlane.xlu0 %845
        %v847 = vadd.f32 %v843, %v846
        %848 = vst.msk [vmem:[%s841] sm:$0xff] %vm590, %v847
        %s849 = scalar_lea.vmem [#allocation5], 16
        %v850 = vld [vmem:[%s849] sm:$0xff]
        %852 = vset.pattern.permute.xlu0 0
        %853 = vperm.xlu0 %852, %v832
        %v854 = vpop.permute.xlu0 %853
        %v856 = vmul.f32 %v854, %v850
        %v857 = vpack.c.bf16 %v840, %v840
        %v859 = vsel %vm568, %v857, 0
        %v862 = vsel %vm603, %v524, 0
        %864 = vmatprep.subr.bf16.mxu0 0
        %865 = vmatpush1.bf16.msra.mxu0 %v862
        %866 = vmatprep.subr.bf16.mxu0 0
        %867 = vmatpush1.bf16.msra.mxu0 0
        %868 = vmatprep.subr.bf16.mxu0 0
        %869 = vmatpush1.bf16.msra.mxu0 0
        %870 = vmatprep.subr.bf16.mxu0 0
        %871 = vmatpush1.bf16.msra.mxu0 0
        %872 = vmatprep.subr.bf16.mxu0 0
        %873 = vmatpush1.bf16.msra.mxu0 0
        %874 = vmatprep.subr.bf16.mxu0 0
        %875 = vmatpush1.bf16.msra.mxu0 0
        %876 = vmatprep.subr.bf16.mxu0 0
        %877 = vmatpush1.bf16.msra.mxu0 0
        %878 = vmatprep.subr.bf16.mxu0 0
        %879 = vmatpush1.bf16.msra.mxu0 0
        %880 = vmatprep.subr.bf16.mxu0 0
        %881 = vmatpush1.bf16.msra.mxu0 0
        %882 = vmatprep.subr.bf16.mxu0 0
        %883 = vmatpush1.bf16.msra.mxu0 0
        %884 = vmatprep.subr.bf16.mxu0 0
        %885 = vmatpush1.bf16.msra.mxu0 0
        %886 = vmatprep.subr.bf16.mxu0 0
        %887 = vmatpush1.bf16.msra.mxu0 0
        %888 = vmatprep.subr.bf16.mxu0 0
        %889 = vmatpush1.bf16.msra.mxu0 0
        %890 = vmatprep.subr.bf16.mxu0 0
        %891 = vmatpush1.bf16.msra.mxu0 0
        %892 = vmatprep.subr.bf16.mxu0 0
        %893 = vmatpush1.bf16.msra.mxu0 0
        %894 = vmatprep.subr.bf16.mxu0 0
        %895 = vmatpush1.bf16.msra.mxu0 0
        %896 = vmatprep.mubr.bf16.mxu0 0
        %897 = vmatmul.mubr.bf16.gmra.mrb[0].mxu0 %v859
        %v898 = vpop.f32.mrb[0].mxu0
        %v899 = vadd.f32 0.0, %v898
        %v900 = vpop.f32.mrb[0].mxu0
        %v901 = vpop.f32.mrb[0].mxu0
        %v902 = vpop.f32.mrb[0].mxu0
        %903 = vdwg.mxu0
        %v904 = vadd.f32 %v856, %v899
        %905 = vst [vmem:[%s849] sm:$0xff] %v904
        %906 = vst.msk [vmem:[%s824] sm:$0xff] %vm590, %v829
        %v908 = vunpack.c.h.b16 %v526
        %v909 = vpack.c.b16 %v908, %v908
        %v912 = vunpack.c.h.b16 %v522
        %v913 = vpack.c.b16 %v912, %v912
        %915 = vmatprep.subr.bf16.mxu0 0
        %916 = vmatpush1.bf16.xpose.msra.mxu0 %v913
        %917 = vmatprep.subr.bf16.mxu0 0
        %918 = vmatpush1.bf16.xpose.msra.mxu0 0
        %919 = vmatprep.subr.bf16.mxu0 0
        %920 = vmatpush1.bf16.xpose.msra.mxu0 0
        %921 = vmatprep.subr.bf16.mxu0 0
        %922 = vmatpush1.bf16.xpose.msra.mxu0 0
        %923 = vmatprep.subr.bf16.mxu0 0
        %924 = vmatpush1.bf16.xpose.msra.mxu0 0
        %925 = vmatprep.subr.bf16.mxu0 0
        %926 = vmatpush1.bf16.xpose.msra.mxu0 0
        %927 = vmatprep.subr.bf16.mxu0 0
        %928 = vmatpush1.bf16.xpose.msra.mxu0 0
        %929 = vmatprep.subr.bf16.mxu0 0
        %930 = vmatpush1.bf16.xpose.msra.mxu0 0
        %931 = vmatprep.subr.bf16.mxu0 0
        %932 = vmatpush1.bf16.xpose.msra.mxu0 0
        %933 = vmatprep.subr.bf16.mxu0 0
        %934 = vmatpush1.bf16.xpose.msra.mxu0 0
        %935 = vmatprep.subr.bf16.mxu0 0
        %936 = vmatpush1.bf16.xpose.msra.mxu0 0
        %937 = vmatprep.subr.bf16.mxu0 0
        %938 = vmatpush1.bf16.xpose.msra.mxu0 0
        %939 = vmatprep.subr.bf16.mxu0 0
        %940 = vmatpush1.bf16.xpose.msra.mxu0 0
        %941 = vmatprep.subr.bf16.mxu0 0
        %942 = vmatpush1.bf16.xpose.msra.mxu0 0
        %943 = vmatprep.subr.bf16.mxu0 0
        %944 = vmatpush1.bf16.xpose.msra.mxu0 0
        %945 = vmatprep.subr.bf16.mxu0 0
        %946 = vmatpush1.bf16.xpose.msra.mxu0 0
        %947 = vmatprep.mubr.bf16.mxu0 0
        %948 = vmatmul.mubr.bf16.gmra.mrb[0].mxu0 %v909
        %v949 = vpop.f32.mrb[0].mxu0
        %v950 = vadd.f32 0.0, %v949
        %v951 = vpop.f32.mrb[0].mxu0
        %v952 = vpop.f32.mrb[0].mxu0
        %v953 = vpop.f32.mrb[0].mxu0
        %954 = vdwg.mxu0
        %s955 = scalar_lea.vmem [#allocation3], 24
        %v956 = vld [vmem:[%s955] sm:$0xff]
        %v957 = vsel %vm568, %v950, -inf
        %958 = vmax.xlane.f32.xlu0 %v957
        %v959 = vpop.xlane.xlu0 %958
        %v960 = vmax.f32 %v956, %v959
        %v961 = vsub.f32 %v956, %v960
        %v962 = vmul.f32 %v961, 1.442695
        %v963 = vpow.pop %v962
        %965 = vset.pattern.permute.xlu0 0
        %966 = vperm.xlu0 %965, %v960
        %v967 = vpop.permute.xlu0 %966
        %v969 = vsub.f32 %v950, %v967
        %v970 = vmul.f32 %v969, 1.442695
        %v971 = vpow.pop %v970
        %s972 = scalar_lea.vmem [#allocation4], 24
        %v973 = vld [vmem:[%s972] sm:$0xff]
        %v974 = vmul.f32 %v963, %v973
        %v975 = vsel %vm568, %v971, 0.0
        %976 = vadd.xlane.f32.xlu0 %v975
        %v977 = vpop.xlane.xlu0 %976
        %v978 = vadd.f32 %v974, %v977
        %979 = vst.msk [vmem:[%s972] sm:$0xff] %vm590, %v978
        %s980 = scalar_lea.vmem [#allocation5], 24
        %v981 = vld [vmem:[%s980] sm:$0xff]
        %983 = vset.pattern.permute.xlu0 0
        %984 = vperm.xlu0 %983, %v963
        %v985 = vpop.permute.xlu0 %984
        %v987 = vmul.f32 %v985, %v981
        %v988 = vpack.c.bf16 %v971, %v971
        %v990 = vunpack.c.h.b16 %v524
        %v991 = vpack.c.b16 %v990, %v990
        %v993 = vsel %vm568, %v988, 0
        %v996 = vsel %vm603, %v991, 0
        %998 = vmatprep.subr.bf16.mxu0 0
        %999 = vmatpush1.bf16.msra.mxu0 %v996
        %1000 = vmatprep.subr.bf16.mxu0 0
        %1001 = vmatpush1.bf16.msra.mxu0 0
        %1002 = vmatprep.subr.bf16.mxu0 0
        %1003 = vmatpush1.bf16.msra.mxu0 0
        %1004 = vmatprep.subr.bf16.mxu0 0
        %1005 = vmatpush1.bf16.msra.mxu0 0
        %1006 = vmatprep.subr.bf16.mxu0 0
        %1007 = vmatpush1.bf16.msra.mxu0 0
        %1008 = vmatprep.subr.bf16.mxu0 0
        %1009 = vmatpush1.bf16.msra.mxu0 0
        %1010 = vmatprep.subr.bf16.mxu0 0
        %1011 = vmatpush1.bf16.msra.mxu0 0
        %1012 = vmatprep.subr.bf16.mxu0 0
        %1013 = vmatpush1.bf16.msra.mxu0 0
        %1014 = vmatprep.subr.bf16.mxu0 0
        %1015 = vmatpush1.bf16.msra.mxu0 0
        %1016 = vmatprep.subr.bf16.mxu0 0
        %1017 = vmatpush1.bf16.msra.mxu0 0
        %1018 = vmatprep.subr.bf16.mxu0 0
        %1019 = vmatpush1.bf16.msra.mxu0 0
        %1020 = vmatprep.subr.bf16.mxu0 0
        %1021 = vmatpush1.bf16.msra.mxu0 0
        %1022 = vmatprep.subr.bf16.mxu0 0
        %1023 = vmatpush1.bf16.msra.mxu0 0
        %1024 = vmatprep.subr.bf16.mxu0 0
        %1025 = vmatpush1.bf16.msra.mxu0 0
        %1026 = vmatprep.subr.bf16.mxu0 0
        %1027 = vmatpush1.bf16.msra.mxu0 0
        %1028 = vmatprep.subr.bf16.mxu0 0
        %1029 = vmatpush1.bf16.msra.mxu0 0
        %1030 = vmatprep.mubr.bf16.mxu0 0
        %1031 = vmatmul.mubr.bf16.gmra.mrb[0].mxu0 %v993
        %v1032 = vpop.f32.mrb[0].mxu0
        %v1033 = vadd.f32 0.0, %v1032
        %v1034 = vpop.f32.mrb[0].mxu0
        %v1035 = vpop.f32.mrb[0].mxu0
        %v1036 = vpop.f32.mrb[0].mxu0
        %1037 = vdwg.mxu0
        %v1038 = vadd.f32 %v987, %v1033
        %1039 = vst [vmem:[%s980] sm:$0xff] %v1038
        %1040 = vst.msk [vmem:[%s955] sm:$0xff] %vm590, %v960
        // Predicated region
        $region49: #{tpu_custom_call.1} parent=43 // pred_check
          %p1041 = pneg %p314
        $region50: #{tpu_custom_call.1} parent=43 // pred_check_branch
          %1043 = sbr.rel (%p1041) target = $region52
        $region51: #{tpu_custom_call.1} parent=43 // pred_region
          %v1044 = vld [vmem:[#allocation4] sm:$0xff]
          %v1045 = vrcp.pop %v1044
          %v1046 = vld [vmem:[#allocation5] sm:$0xff]
          %1048 = vset.pattern.permute.xlu0 0
          %1049 = vperm.xlu0 %1048, %v1045
          %v1050 = vpop.permute.xlu0 %1049
          %v1052 = vmul.f32 %v1046, %v1050
          %v1053 = vpack.c.bf16 %v1052, %v1052
          %v1054 = vld [vmem:[%s715] sm:$0xff]
          %v1055 = vrcp.pop %v1054
          %v1056 = vld [vmem:[%s723] sm:$0xff]
          %1058 = vset.pattern.permute.xlu0 0
          %1059 = vperm.xlu0 %1058, %v1055
          %v1060 = vpop.permute.xlu0 %1059
          %v1062 = vmul.f32 %v1056, %v1060
          %v1063 = vpack.c.bf16 %v1062, %v1062
          %v1064 = vld [vmem:[%s841] sm:$0xff]
          %v1065 = vrcp.pop %v1064
          %v1066 = vld [vmem:[%s849] sm:$0xff]
          %1068 = vset.pattern.permute.xlu0 0
          %1069 = vperm.xlu0 %1068, %v1065
          %v1070 = vpop.permute.xlu0 %1069
          %v1072 = vmul.f32 %v1066, %v1070
          %v1073 = vpack.c.bf16 %v1072, %v1072
          %v1074 = vld [vmem:[%s972] sm:$0xff]
          %v1075 = vrcp.pop %v1074
          %v1076 = vld [vmem:[%s980] sm:$0xff]
          %1078 = vset.pattern.permute.xlu0 0
          %1079 = vperm.xlu0 %1078, %v1075
          %v1080 = vpop.permute.xlu0 %1079
          %v1082 = vmul.f32 %v1076, %v1080
          %v1083 = vpack.c.bf16 %v1082, %v1082
          %v1084 = vld [vmem:[%s4] sm:$0xf]
          %v1085 = vld [vmem:[%s4 + $0x4] sm:$0xf]
          %v1086 = vld [vmem:[%s4 + $0x8] sm:$0xf]
          %v1087 = vld [vmem:[%s4 + $0xc] sm:$0xf]
          %v1088 = vld [vmem:[%s4 + $0x10] sm:$0xf]
          %v1089 = vld [vmem:[%s4 + $0x14] sm:$0xf]
          %v1090 = vld [vmem:[%s4 + $0x18] sm:$0xf]
          %v1091 = vld [vmem:[%s4 + $0x1c] sm:$0xf]
          %v1092 = vld [vmem:[%s4 + $0x20] sm:$0xf]
          %v1093 = vld [vmem:[%s4 + $0x24] sm:$0xf]
          %v1094 = vld [vmem:[%s4 + $0x28] sm:$0xf]
          %v1095 = vld [vmem:[%s4 + $0x2c] sm:$0xf]
          %v1096 = vld [vmem:[%s4 + $0x30] sm:$0xf]
          %v1097 = vld [vmem:[%s4 + $0x34] sm:$0xf]
          %v1098 = vld [vmem:[%s4 + $0x38] sm:$0xf]
          %v1099 = vld [vmem:[%s4 + $0x3c] sm:$0xf]
          %v1100 = vld [vmem:[%s4 + $0x40] sm:$0xf]
          %v1101 = vld [vmem:[%s4 + $0x44] sm:$0xf]
          %v1102 = vld [vmem:[%s4 + $0x48] sm:$0xf]
          %v1103 = vld [vmem:[%s4 + $0x4c] sm:$0xf]
          %v1104 = vld [vmem:[%s4 + $0x50] sm:$0xf]
          %v1105 = vld [vmem:[%s4 + $0x54] sm:$0xf]
          %v1106 = vld [vmem:[%s4 + $0x58] sm:$0xf]
          %v1107 = vld [vmem:[%s4 + $0x5c] sm:$0xf]
          %v1108 = vld [vmem:[%s4 + $0x60] sm:$0xf]
          %v1109 = vld [vmem:[%s4 + $0x64] sm:$0xf]
          %v1110 = vld [vmem:[%s4 + $0x68] sm:$0xf]
          %v1111 = vld [vmem:[%s4 + $0x6c] sm:$0xf]
          %v1112 = vld [vmem:[%s4 + $0x70] sm:$0xf]
          %v1113 = vld [vmem:[%s4 + $0x74] sm:$0xf]
          %v1114 = vld [vmem:[%s4 + $0x78] sm:$0xf]
          %v1115 = vld [vmem:[%s4 + $0x7c] sm:$0xf]
          %v1116 = vld [vmem:[%s4 + $0x80] sm:$0xf]
          %v1117 = vld [vmem:[%s4 + $0x84] sm:$0xf]
          %v1118 = vld [vmem:[%s4 + $0x88] sm:$0xf]
          %v1119 = vld [vmem:[%s4 + $0x8c] sm:$0xf]
          %v1120 = vld [vmem:[%s4 + $0x90] sm:$0xf]
          %v1121 = vld [vmem:[%s4 + $0x94] sm:$0xf]
          %v1122 = vld [vmem:[%s4 + $0x98] sm:$0xf]
          %v1123 = vld [vmem:[%s4 + $0x9c] sm:$0xf]
          %v1124 = vld [vmem:[%s4 + $0xa0] sm:$0xf]
          %v1125 = vld [vmem:[%s4 + $0xa4] sm:$0xf]
          %v1126 = vld [vmem:[%s4 + $0xa8] sm:$0xf]
          %v1127 = vld [vmem:[%s4 + $0xac] sm:$0xf]
          %v1128 = vld [vmem:[%s4 + $0xb0] sm:$0xf]
          %v1129 = vld [vmem:[%s4 + $0xb4] sm:$0xf]
          %v1130 = vld [vmem:[%s4 + $0xb8] sm:$0xf]
          %v1131 = vld [vmem:[%s4 + $0xbc] sm:$0xf]
          %v1132 = vld [vmem:[%s4 + $0xc0] sm:$0xf]
          %v1133 = vld [vmem:[%s4 + $0xc4] sm:$0xf]
          %v1134 = vld [vmem:[%s4 + $0xc8] sm:$0xf]
          %v1135 = vld [vmem:[%s4 + $0xcc] sm:$0xf]
          %v1136 = vld [vmem:[%s4 + $0xd0] sm:$0xf]
          %v1137 = vld [vmem:[%s4 + $0xd4] sm:$0xf]
          %v1138 = vld [vmem:[%s4 + $0xd8] sm:$0xf]
          %v1139 = vld [vmem:[%s4 + $0xdc] sm:$0xf]
          %v1140 = vld [vmem:[%s4 + $0xe0] sm:$0xf]
          %v1141 = vld [vmem:[%s4 + $0xe4] sm:$0xf]
          %v1142 = vld [vmem:[%s4 + $0xe8] sm:$0xf]
          %v1143 = vld [vmem:[%s4 + $0xec] sm:$0xf]
          %v1144 = vld [vmem:[%s4 + $0xf0] sm:$0xf]
          %v1145 = vld [vmem:[%s4 + $0xf4] sm:$0xf]
          %v1146 = vld [vmem:[%s4 + $0xf8] sm:$0xf]
          %v1147 = vld [vmem:[%s4 + $0xfc] sm:$0xf]
          %v1148 = vld [vmem:[%s5] sm:$0x1]
          %v1150 = vlaneseq
          %v1151 = vshrl.u32 %v1150, 7
          %v1152 = vsub.s32 0, %v1151
          %v1153 = vrot.slane %v1148, %v1152
          %v1219 = vunpack.c.l.b16 %v1084
          %v1220 = vunpack.c.l.b16 %v1085
          %v1221 = vunpack.c.l.b16 %v1086
          %v1222 = vunpack.c.l.b16 %v1087
          %v1223 = vunpack.c.l.b16 %v1088
          %v1224 = vunpack.c.l.b16 %v1089
          %v1225 = vunpack.c.l.b16 %v1090
          %v1226 = vunpack.c.l.b16 %v1091
          %v1227 = vunpack.c.l.b16 %v1092
          %v1228 = vunpack.c.l.b16 %v1093
          %v1229 = vunpack.c.l.b16 %v1094
          %v1230 = vunpack.c.l.b16 %v1095
          %v1231 = vunpack.c.l.b16 %v1096
          %v1232 = vunpack.c.l.b16 %v1097
          %v1233 = vunpack.c.l.b16 %v1098
          %v1234 = vunpack.c.l.b16 %v1099
          %v1235 = vunpack.c.l.b16 %v1100
          %v1236 = vunpack.c.l.b16 %v1101
          %v1237 = vunpack.c.l.b16 %v1102
          %v1238 = vunpack.c.l.b16 %v1103
          %v1239 = vunpack.c.l.b16 %v1104
          %v1240 = vunpack.c.l.b16 %v1105
          %v1241 = vunpack.c.l.b16 %v1106
          %v1242 = vunpack.c.l.b16 %v1107
          %v1243 = vunpack.c.l.b16 %v1108
          %v1244 = vunpack.c.l.b16 %v1109
          %v1245 = vunpack.c.l.b16 %v1110
          %v1246 = vunpack.c.l.b16 %v1111
          %v1247 = vunpack.c.l.b16 %v1112
          %v1248 = vunpack.c.l.b16 %v1113
          %v1249 = vunpack.c.l.b16 %v1114
          %v1250 = vunpack.c.l.b16 %v1115
          %v1251 = vunpack.c.l.b16 %v1116
          %v1252 = vunpack.c.l.b16 %v1117
          %v1253 = vunpack.c.l.b16 %v1118
          %v1254 = vunpack.c.l.b16 %v1119
          %v1255 = vunpack.c.l.b16 %v1120
          %v1256 = vunpack.c.l.b16 %v1121
          %v1257 = vunpack.c.l.b16 %v1122
          %v1258 = vunpack.c.l.b16 %v1123
          %v1259 = vunpack.c.l.b16 %v1124
          %v1260 = vunpack.c.l.b16 %v1125
          %v1261 = vunpack.c.l.b16 %v1126
          %v1262 = vunpack.c.l.b16 %v1127
          %v1263 = vunpack.c.l.b16 %v1128
          %v1264 = vunpack.c.l.b16 %v1129
          %v1265 = vunpack.c.l.b16 %v1130
          %v1266 = vunpack.c.l.b16 %v1131
          %v1267 = vunpack.c.l.b16 %v1132
          %v1268 = vunpack.c.l.b16 %v1133
          %v1269 = vunpack.c.l.b16 %v1134
          %v1270 = vunpack.c.l.b16 %v1135
          %v1271 = vunpack.c.l.b16 %v1136
          %v1272 = vunpack.c.l.b16 %v1137
          %v1273 = vunpack.c.l.b16 %v1138
          %v1274 = vunpack.c.l.b16 %v1139
          %v1275 = vunpack.c.l.b16 %v1140
          %v1276 = vunpack.c.l.b16 %v1141
          %v1277 = vunpack.c.l.b16 %v1142
          %v1278 = vunpack.c.l.b16 %v1143
          %v1279 = vunpack.c.l.b16 %v1144
          %v1280 = vunpack.c.l.b16 %v1145
          %v1281 = vunpack.c.l.b16 %v1146
          %v1282 = vunpack.c.l.b16 %v1147
          %v1283 = vpack.c.b16 %v1220, %v1219
          %v1284 = vpack.c.b16 %v1222, %v1221
          %v1285 = vpack.c.b16 %v1224, %v1223
          %v1286 = vpack.c.b16 %v1226, %v1225
          %v1287 = vpack.c.b16 %v1228, %v1227
          %v1288 = vpack.c.b16 %v1230, %v1229
          %v1289 = vpack.c.b16 %v1232, %v1231
          %v1290 = vpack.c.b16 %v1234, %v1233
          %v1291 = vpack.c.b16 %v1236, %v1235
          %v1292 = vpack.c.b16 %v1238, %v1237
          %v1293 = vpack.c.b16 %v1240, %v1239
          %v1294 = vpack.c.b16 %v1242, %v1241
          %v1295 = vpack.c.b16 %v1244, %v1243
          %v1296 = vpack.c.b16 %v1246, %v1245
          %v1297 = vpack.c.b16 %v1248, %v1247
          %v1298 = vpack.c.b16 %v1250, %v1249
          %v1299 = vpack.c.b16 %v1252, %v1251
          %v1300 = vpack.c.b16 %v1254, %v1253
          %v1301 = vpack.c.b16 %v1256, %v1255
          %v1302 = vpack.c.b16 %v1258, %v1257
          %v1303 = vpack.c.b16 %v1260, %v1259
          %v1304 = vpack.c.b16 %v1262, %v1261
          %v1305 = vpack.c.b16 %v1264, %v1263
          %v1306 = vpack.c.b16 %v1266, %v1265
          %v1307 = vpack.c.b16 %v1268, %v1267
          %v1308 = vpack.c.b16 %v1270, %v1269
          %v1309 = vpack.c.b16 %v1272, %v1271
          %v1310 = vpack.c.b16 %v1274, %v1273
          %v1311 = vpack.c.b16 %v1276, %v1275
          %v1312 = vpack.c.b16 %v1278, %v1277
          %v1313 = vpack.c.b16 %v1280, %v1279
          %v1314 = vpack.c.b16 %v1282, %v1281
          %1347 = vmatprep.subr.bf16.mxu0 0
          %1348 = vmatpush1.bf16.msra.mxu0 %v1283
          %1349 = vmatprep.subr.bf16.mxu0 0
          %1350 = vmatpush1.bf16.msra.mxu0 %v1284
          %1351 = vmatprep.subr.bf16.mxu0 0
          %1352 = vmatpush1.bf16.msra.mxu0 %v1285
          %1353 = vmatprep.subr.bf16.mxu0 0
          %1354 = vmatpush1.bf16.msra.mxu0 %v1286
          %1355 = vmatprep.subr.bf16.mxu0 0
          %1356 = vmatpush1.bf16.msra.mxu0 %v1287
          %1357 = vmatprep.subr.bf16.mxu0 0
          %1358 = vmatpush1.bf16.msra.mxu0 %v1288
          %1359 = vmatprep.subr.bf16.mxu0 0
          %1360 = vmatpush1.bf16.msra.mxu0 %v1289
          %1361 = vmatprep.subr.bf16.mxu0 0
          %1362 = vmatpush1.bf16.msra.mxu0 %v1290
          %1363 = vmatprep.subr.bf16.mxu0 0
          %1364 = vmatpush1.bf16.msra.mxu0 %v1291
          %1365 = vmatprep.subr.bf16.mxu0 0
          %1366 = vmatpush1.bf16.msra.mxu0 %v1292
          %1367 = vmatprep.subr.bf16.mxu0 0
          %1368 = vmatpush1.bf16.msra.mxu0 %v1293
          %1369 = vmatprep.subr.bf16.mxu0 0
          %1370 = vmatpush1.bf16.msra.mxu0 %v1294
          %1371 = vmatprep.subr.bf16.mxu0 0
          %1372 = vmatpush1.bf16.msra.mxu0 %v1295
          %1373 = vmatprep.subr.bf16.mxu0 0
          %1374 = vmatpush1.bf16.msra.mxu0 %v1296
          %1375 = vmatprep.subr.bf16.mxu0 0
          %1376 = vmatpush1.bf16.msra.mxu0 %v1297
          %1377 = vmatprep.subr.bf16.mxu0 0
          %1378 = vmatpush1.bf16.msra.mxu0 %v1298
          %1379 = vmatprep.mubr.bf16.mxu0 %v1063
          %1380 = vmatmul.mubr.bf16.gmra.mrb[0].mxu0 %v1053
          %v1381 = vpop.f32.mrb[0].mxu0
          %v1382 = vadd.f32 %v1153, %v1381
          %v1383 = vpop.f32.mrb[0].mxu0
          %v1384 = vpop.f32.mrb[0].mxu0
          %v1385 = vpop.f32.mrb[0].mxu0
          %1386 = vdwg.mxu0
          %1387 = vmatprep.subr.bf16.mxu0 0
          %1388 = vmatpush1.bf16.msra.mxu0 %v1299
          %1389 = vmatprep.subr.bf16.mxu0 0
          %1390 = vmatpush1.bf16.msra.mxu0 %v1300
          %1391 = vmatprep.subr.bf16.mxu0 0
          %1392 = vmatpush1.bf16.msra.mxu0 %v1301
          %1393 = vmatprep.subr.bf16.mxu0 0
          %1394 = vmatpush1.bf16.msra.mxu0 %v1302
          %1395 = vmatprep.subr.bf16.mxu0 0
          %1396 = vmatpush1.bf16.msra.mxu0 %v1303
          %1397 = vmatprep.subr.bf16.mxu0 0
          %1398 = vmatpush1.bf16.msra.mxu0 %v1304
          %1399 = vmatprep.subr.bf16.mxu0 0
          %1400 = vmatpush1.bf16.msra.mxu0 %v1305
          %1401 = vmatprep.subr.bf16.mxu0 0
          %1402 = vmatpush1.bf16.msra.mxu0 %v1306
          %1403 = vmatprep.subr.bf16.mxu0 0
          %1404 = vmatpush1.bf16.msra.mxu0 %v1307
          %1405 = vmatprep.subr.bf16.mxu0 0
          %1406 = vmatpush1.bf16.msra.mxu0 %v1308
          %1407 = vmatprep.subr.bf16.mxu0 0
          %1408 = vmatpush1.bf16.msra.mxu0 %v1309
          %1409 = vmatprep.subr.bf16.mxu0 0
          %1410 = vmatpush1.bf16.msra.mxu0 %v1310
          %1411 = vmatprep.subr.bf16.mxu0 0
          %1412 = vmatpush1.bf16.msra.mxu0 %v1311
          %1413 = vmatprep.subr.bf16.mxu0 0
          %1414 = vmatpush1.bf16.msra.mxu0 %v1312
          %1415 = vmatprep.subr.bf16.mxu0 0
          %1416 = vmatpush1.bf16.msra.mxu0 %v1313
          %1417 = vmatprep.subr.bf16.mxu0 0
          %1418 = vmatpush1.bf16.msra.mxu0 %v1314
          %1419 = vmatprep.mubr.bf16.mxu0 %v1083
          %1420 = vmatmul.mubr.bf16.gmra.mrb[0].mxu0 %v1073
          %v1421 = vpop.f32.mrb[0].mxu0
          %v1422 = vadd.f32 %v1382, %v1421
          %v1423 = vpop.f32.mrb[0].mxu0
          %v1424 = vpop.f32.mrb[0].mxu0
          %v1425 = vpop.f32.mrb[0].mxu0
          %1426 = vdwg.mxu0
          %v1427 = vld [vmem:[%s303] sm:$0xff]
          %v1428 = vmul.f32 %v1427, 2.0
          %v1429 = vadd.f32 %v1428, %v1422
          %vm1430 = vcmask 261120
          %1431 = vst.msk [vmem:[%s296] sm:$0xff] %vm1430, %v1429
        $region52: #{tpu_custom_call.1} parent=43 // pred_fallthru
          _
        %s1432 = sand.u32 %s189, 1
        %s1433 = scalar_lea.sflag [#allocation7], %s1432
        %s1434 = sand.u32 %s189, 1
        %s1435 = smul.addr %s1434, 8
        %s1436 = scalar_lea.vmem [#allocation6], %s1435
        // Predicated region
        $region53: #{tpu_custom_call.1} parent=43 // pred_check
          %p1437 = pneg %p199
        $region54: #{tpu_custom_call.1} parent=43 // pred_check_branch
          %1439 = sbr.rel (%p1437) target = $region56
        $region55: #{tpu_custom_call.1} parent=43 // pred_region
          %s1441 = ssub.s32 128, 128
          %1442 = vsyncadd %s1433, %s1441
          %s1443 = sadd.s32 %s26, %s25
          %s1444 = smul.addr %s1443, 128
          %s1445 = scalar_lea.hbm %s6, %s1444
          %s1447 = sshll.u32 %s1436, 4
          %s1448 = int_to_ptr.vmem [resolvable:$true] %s1447
          %1450 = dma.vmem_to_hbm [thread:$0]  %s1448, 128, %s1445, %s1433
        $region56: #{tpu_custom_call.1} parent=43 // pred_fallthru
          _
      $region44: #{tpu_custom_call.1} parent=5 // pred_fallthru
        _
      %p1451 = scmp.le.s32.totalorder 2, %s15
      // Predicated region
      $region57: #{tpu_custom_call.1} parent=5 // pred_check
        %p1452 = pneg %p1451
      $region58: #{tpu_custom_call.1} parent=5 // pred_check_branch
        %1454 = sbr.rel (%p1452) target = $region60
      $region59: #{tpu_custom_call.1} parent=5 // pred_region
        %s1455 = ssub.s32 %s15, 2
        // Predicated region
        $region61: #{tpu_custom_call.1} parent=59 // pred_check
          %p1456 = pneg %p205
        $region62: #{tpu_custom_call.1} parent=59 // pred_check_branch
          %1458 = sbr.rel (%p1456) target = $region64
        $region63: #{tpu_custom_call.1} parent=59 // pred_region
          %s1459 = sand.u32 %s190, 1
          %s1460 = scalar_lea.sflag [#allocation7], %s1459
          %s1461 = sand.u32 %s190, 1
          %s1462 = smul.addr %s1461, 8
          %s1463 = scalar_lea.vmem [#allocation6], %s1462
          %1464 = dma.done %s1460, 128
        $region64: #{tpu_custom_call.1} parent=59 // pred_fallthru
          _
      $region60: #{tpu_custom_call.1} parent=5 // pred_fallthru
        _
    $region6: #{tpu_custom_call.1} parent=1 // loop_footer
      %s19 = sadd.s32 1, %s15
    $region7: #{tpu_custom_call.1} parent=1 // loop_footer_branch
      %14 = sbr.rel target = $region3
    $region8: #{tpu_custom_call.1} parent=1 // loop_exit
      _
    %1465 = vsyncpa [#allocation7], 1
    %s1466 = scalar_lea.sflag [#allocation7], 1
    %1467 = vsyncpa %s1466, 1

</llo_original>
